<compile_context>
chip_gen: v7x
topology: tpu7x:2x2x1
jax: 0.10.0
libtpu: 0.0.40
codegen_flags: <defaults>
</compile_context>

<pallas_src>
import functools
import math

import jax
import jax.numpy as jnp
from jax.experimental import pallas as pl
from jax.experimental.pallas import tpu as pltpu


# ----------------------------------------------------------------------------
# Pallas kernel: tiled GEMM + folded (bias + BatchNorm) affine + fused epilogue
# ----------------------------------------------------------------------------
def _gemm_affine_kernel(a_ref, b_ref, scale_ref, shift_ref, colmask_ref, o_ref,
                        *, epilogue, b_resident):
    if b_resident:
        # Whole weight (Jn, K, tn) is resident in VMEM (constant index_map);
        # pick this grid step's column slab with a leading-axis dynamic index.
        j = pl.program_id(1)
        b = b_ref[j]                      # (K, tn)
        scale = scale_ref[j]              # (1, tn)
        shift = shift_ref[j]
    else:
        b = b_ref[...]
        scale = scale_ref[...]
        shift = shift_ref[...]

    # bf16 x bf16 -> f32 accumulation on the MXU.
    acc = jnp.dot(a_ref[...], b, preferred_element_type=jnp.float32)
    acc = acc * scale + shift             # conv bias folded into shift

    if epilogue == "relu":
        acc = jnp.maximum(acc, 0.0)
    elif epilogue == "sigmoid18_27":
        # DCNv2 modulation-mask lanes (global cols 18..26): precomputed column
        # mask operand (no per-tile iota/compares); reciprocal on the EUP.
        m = colmask_ref[j] if b_resident else colmask_ref[...]
        sig = pl.reciprocal(1.0 + jnp.exp(-acc), approx=True)
        acc = jnp.where(m > 0.5, sig, acc)

    o_ref[...] = acc.astype(o_ref.dtype)


def _vmem_capacity_bytes():
    try:
        return int(pltpu.get_tpu_info().vmem_capacity_bytes)
    except Exception:
        return 64 * 1024 * 1024           # conservative (v7x per-core VMEM)


def matmul_affine_pallas(a, b, scale, shift, *, epilogue="none",
                         out_dtype=jnp.float32):
    """out = (a @ b) * scale + shift, optional relu / masked-sigmoid epilogue.

    a: (M, K) bf16, b: (K, Nc) bf16, scale/shift: (Nc,) f32 -> (M, Nc) out_dtype.
    K and N are zero-padded to lane-dense multiples of 128; the weight matrix
    is kept resident in VMEM whenever it fits.
    """
    M, K = a.shape
    K2, Nc = b.shape
    assert K == K2
    a = a.astype(jnp.bfloat16)
    b = b.astype(jnp.bfloat16)

    cap = _vmem_capacity_bytes()                       # 128 MiB v5e/v6e, 64 MiB v7x
    budget = max(16 << 20, (2 * cap) // 5)             # tile-footprint budget
    vmem_limit = max(32 << 20, min(cap - (16 << 20), 100 << 20))

    # Lane-align K (MXU depth) and N (output lanes).
    Kp = pl.cdiv(K, 128) * 128
    Np0 = pl.cdiv(Nc, 128) * 128
    tn = Np0 if Np0 <= 512 else 256                    # 256-wide RHS fills v6e/v7x MXU
    Np = pl.cdiv(Nc, tn) * tn
    Jn = Np // tn
    out_bytes = jnp.dtype(out_dtype).itemsize

    # Weight residency: DMA B once and keep it in VMEM unless it is too large.
    b_resident = (2 * Kp * Np * 2) <= min(budget // 2, 16 << 20)
    b_tile_bytes = (2 * Kp * Np * 2) if b_resident else (2 * Kp * tn * 2)

    # Row-tile size against the VMEM budget (double-buffered A + out + B).
    tm = 512
    while tm > 64 and (2 * tm * Kp * 2 + 2 * tm * tn * out_bytes + b_tile_bytes) > budget:
        tm //= 2
    # Keep >=2 row tiles when possible so the M axis shards across v7x's 2 TCs.
    while tm > 128 and pl.cdiv(M, tm) < 2:
        tm //= 2
    Mp = pl.cdiv(M, tm) * tm
    # TODO(synk): add a K grid axis (f32 VMEM accumulator, pl.when init/flush)
    # once 9*Ci outgrows the full-K-resident VMEM budget (esp. v7x 64 MiB).

    # Zero-pad to lane-dense shapes (zeros contribute nothing to the GEMM).
    a_p = jnp.pad(a, ((0, Mp - M), (0, Kp - K)))
    b_p = jnp.pad(b, ((0, Kp - K), (0, Np - Nc)))
    scale_p = jnp.pad(scale.astype(jnp.float32), (0, Np - Nc))
    shift_p = jnp.pad(shift.astype(jnp.float32), (0, Np - Nc))
    col = jnp.arange(Np, dtype=jnp.int32)
    if epilogue == "sigmoid18_27":
        colmask = ((col >= 18) & (col < 27)).astype(jnp.float32)
    else:
        colmask = jnp.zeros((Np,), jnp.float32)

    if b_resident:
        b_in = b_p.reshape(Kp, Jn, tn).transpose(1, 0, 2)      # (Jn, Kp, tn)
        scale_in = scale_p.reshape(Jn, 1, tn)
        shift_in = shift_p.reshape(Jn, 1, tn)
        mask_in = colmask.reshape(Jn, 1, tn)
        b_spec = pl.BlockSpec((Jn, Kp, tn), lambda i, j: (0, 0, 0))   # resident
        v_spec = pl.BlockSpec((Jn, 1, tn), lambda i, j: (0, 0, 0))    # resident
    else:
        b_in = b_p
        scale_in = scale_p.reshape(1, Np)
        shift_in = shift_p.reshape(1, Np)
        mask_in = colmask.reshape(1, Np)
        b_spec = pl.BlockSpec((Kp, tn), lambda i, j: (0, j))          # streamed
        v_spec = pl.BlockSpec((1, tn), lambda i, j: (0, j))

    kernel = functools.partial(_gemm_affine_kernel, epilogue=epilogue,
                               b_resident=b_resident)
    out = pl.pallas_call(
        kernel,
        out_shape=jax.ShapeDtypeStruct((Mp, Np), out_dtype),
        grid_spec=pltpu.PrefetchScalarGridSpec(
            num_scalar_prefetch=0,
            grid=(Mp // tm, Jn),
            in_specs=[
                pl.BlockSpec((tm, Kp), lambda i, j: (i, 0)),   # activation row tile
                b_spec,                                        # weights
                v_spec,                                        # folded BN scale
                v_spec,                                        # folded BN shift (+bias)
                v_spec,                                        # sigmoid column mask
            ],
            out_specs=pl.BlockSpec((tm, tn), lambda i, j: (i, j)),
        ),
        compiler_params=pltpu.CompilerParams(
            dimension_semantics=("parallel", "parallel"),
            vmem_limit_bytes=int(vmem_limit),
        ),
    )(a_p, b_in, scale_in, shift_in, mask_in)
    return out[:M, :Nc]


def matmul_affine_ref(a, b, scale, shift, *, epilogue="none", out_dtype=jnp.float32):
    del out_dtype  # reference stays in f32
    out = jnp.dot(a.astype(jnp.float32), b.astype(jnp.float32),
                  precision=jax.lax.Precision.HIGHEST)
    out = out * scale[None, :] + shift[None, :]
    if epilogue == "relu":
        out = jnp.maximum(out, 0.0)
    elif epilogue == "sigmoid18_27":
        col = jnp.arange(out.shape[1])[None, :]
        out = jnp.where((col >= 18) & (col < 27), jax.nn.sigmoid(out), out)
    return out


# ----------------------------------------------------------------------------
# Plain-JAX glue: bilinear sampling exactly matching DCNv2 dmcn_im2col_bilinear
# ----------------------------------------------------------------------------
# TODO(synk): data-dependent per-element gather has no clean/efficient Pallas
# TPU lowering; the deformable bilinear sampling stays in plain JAX (a manual
# DMA gather kernel with scalar-prefetched indices is the long-term path).
def _bilinear_sample(x_nhwc, py, px):
    """x_nhwc: (N,H,W,Ci) bf16; py/px: (N,H,W,9) f32 sample coords -> (N,H,W,9,Ci) f32."""
    N, H, W, Ci = x_nhwc.shape
    h_low = jnp.floor(py)
    w_low = jnp.floor(px)
    lh = py - h_low
    lw = px - w_low
    hh = 1.0 - lh
    hw = 1.0 - lw
    h_low_i = h_low.astype(jnp.int32)
    w_low_i = w_low.astype(jnp.int32)
    h_high_i = h_low_i + 1
    w_high_i = w_low_i + 1

    x_flat = x_nhwc.reshape(N, H * W, Ci)

    def gather(hi, wi, valid):
        lin = jnp.clip(hi, 0, H - 1) * W + jnp.clip(wi, 0, W - 1)
        lin = lin.reshape(N, H * W * 9)
        v = jnp.take_along_axis(x_flat, lin[:, :, None], axis=1)
        v = v.reshape(N, H, W, 9, Ci)
        return v * valid[..., None].astype(v.dtype)

    v1 = gather(h_low_i, w_low_i, (h_low_i >= 0) & (w_low_i >= 0))
    v2 = gather(h_low_i, w_high_i, (h_low_i >= 0) & (w_high_i <= W - 1))
    v3 = gather(h_high_i, w_low_i, (h_high_i <= H - 1) & (w_low_i >= 0))
    v4 = gather(h_high_i, w_high_i, (h_high_i <= H - 1) & (w_high_i <= W - 1))

    val = ((hh * hw)[..., None] * v1 + (hh * lw)[..., None] * v2 +
           (lh * hw)[..., None] * v3 + (lh * lw)[..., None] * v4)

    inside = (py > -1.0) & (px > -1.0) & (py < H) & (px < W)
    return val * inside[..., None].astype(val.dtype)


# ----------------------------------------------------------------------------
# Full DeformConv forward: DCNv2(chi->cho, 3x3, s1, p1, d1, dg1) + BN + ReLU
# ----------------------------------------------------------------------------
def deform_conv_forward(x_nchw, params, matmul_fn):
    N, Ci, H, W = x_nchw.shape
    x = jnp.transpose(x_nchw, (0, 2, 3, 1))                       # NHWC f32
    x_bf = x.astype(jnp.bfloat16)                                 # halve gather/im2col bytes

    # --- conv_offset_mask: regular 3x3 conv (stride 1, pad 1, bias) via im2col GEMM.
    # TODO(synk): replace this im2col with a direct in-Pallas 3x3 conv (9 shifted
    # accumulating matmuls reading x) to remove the patches HBM round trip.
    xp = jnp.pad(x_bf, ((0, 0), (1, 1), (1, 1), (0, 0)))
    patches = jnp.stack(
        [xp[:, ki:ki + H, kj:kj + W, :] for ki in range(3) for kj in range(3)],
        axis=3)                                                   # (N,H,W,9,Ci) bf16
    cols0 = patches.reshape(N * H * W, 9 * Ci)
    w_off = jnp.transpose(params["w_off"], (2, 3, 1, 0)).reshape(9 * Ci, 27)
    w_off = w_off.astype(jnp.bfloat16)
    # bias folded into shift (scale = 1); sigmoid on mask lanes fused in-kernel.
    om = matmul_fn(cols0, w_off, jnp.ones((27,), jnp.float32), params["b_off"],
                   epilogue="sigmoid18_27", out_dtype=jnp.float32)
    om = om.reshape(N, H, W, 27)

    # DCNv2 channel semantics: offset = cat(o1, o2); channel 2k -> dy_k, 2k+1 -> dx_k
    dy = om[..., 0:18:2]                                          # (N,H,W,9)
    dx = om[..., 1:18:2]
    mask = om[..., 18:27]                                         # sigmoid already applied

    # --- sampling coordinates (stride=1, pad=1, dilation=1)
    kk = jnp.arange(9)
    ki = (kk // 3).astype(jnp.float32)
    kj = (kk % 3).astype(jnp.float32)
    hh_grid = jnp.arange(H, dtype=jnp.float32)
    ww_grid = jnp.arange(W, dtype=jnp.float32)
    py = hh_grid[None, :, None, None] - 1.0 + ki[None, None, None, :] + dy
    px = ww_grid[None, None, :, None] - 1.0 + kj[None, None, None, :] + dx

    sampled = _bilinear_sample(x_bf, py, px)                      # (N,H,W,9,Ci) f32
    # Modulation multiply fused with the bf16 downcast (XLA fuses with gather);
    # TODO(synk): for Ci % 128 == 0 this multiply could move inside the Pallas
    # kernel as free VPU work on a layout-free (tm, 9, Ci) view of the A tile.
    cols = (sampled * mask[..., None]).astype(jnp.bfloat16).reshape(N * H * W, 9 * Ci)

    # --- main DCN GEMM + (bias + BatchNorm inference affine) + ReLU, fused in Pallas
    # TODO(synk): BatchNorm uses inference-mode running statistics (eval semantics);
    # training-mode batch-statistic reduction is not implemented.
    Co = params["weight"].shape[0]
    w2 = jnp.transpose(params["weight"], (2, 3, 1, 0)).reshape(9 * Ci, Co)
    w2 = w2.astype(jnp.bfloat16)
    eps = 1e-5
    scale = params["bn_gamma"] / jnp.sqrt(params["bn_var"] + eps)
    shift = params["bn_beta"] + (params["bias"] - params["bn_mean"]) * scale
    out = matmul_fn(cols, w2, scale, shift, epilogue="relu", out_dtype=jnp.bfloat16)
    out = out.reshape(N, H, W, Co)
    return jnp.transpose(out, (0, 3, 1, 2))                       # back to NCHW


# ----------------------------------------------------------------------------
# Deterministic parameter init (shapes from DeformConv.__init__ / DCN)
# ----------------------------------------------------------------------------
def init_params(key, chi, cho):
    k1, k2, k3, k4 = jax.random.split(key, 4)
    stdv = 1.0 / math.sqrt(chi * 3 * 3)
    weight = jax.random.uniform(k1, (cho, chi, 3, 3), jnp.float32, -stdv, stdv)
    bias = jax.random.uniform(k2, (cho,), jnp.float32, -stdv, stdv)
    # conv_offset_mask is zero-initialized in the original module; use small
    # deterministic values here so the deformable sampling path is exercised.
    w_off = 0.1 * jax.random.normal(k3, (27, chi, 3, 3), jnp.float32)
    b_off = 0.1 * jax.random.normal(k4, (27,), jnp.float32)
    # BatchNorm2d defaults: gamma=1, beta=0, running_mean=0, running_var=1
    return dict(
        weight=weight, bias=bias, w_off=w_off, b_off=b_off,
        bn_gamma=jnp.ones((cho,), jnp.float32),
        bn_beta=jnp.zeros((cho,), jnp.float32),
        bn_mean=jnp.zeros((cho,), jnp.float32),
        bn_var=jnp.ones((cho,), jnp.float32),
    )


if __name__ == "__main__":
    key = jax.random.PRNGKey(0)
    kx, kp = jax.random.split(key)

    N, chi, cho, H, W = 2, 4, 8, 16, 16
    x = jax.random.normal(kx, (N, chi, H, W), jnp.float32)
    params = init_params(kp, chi, cho)

    fwd = jax.jit(functools.partial(deform_conv_forward, matmul_fn=matmul_affine_pallas))
    out = jax.block_until_ready(fwd(x, params))

    # sanity check against a pure-JAX reference (same glue, same bf16 operands,
    # jnp GEMM at HIGHEST precision; pallas path stores bf16 main-conv output)
    out_ref = deform_conv_forward(x, params, matmul_affine_ref)
    assert out.shape == (N, cho, H, W)
    out_f32 = out.astype(jnp.float32)
    max_err = float(jnp.max(jnp.abs(out_f32 - out_ref)))
    assert jnp.allclose(out_f32, out_ref, atol=2e-2, rtol=2e-2), max_err

    print("KERNEL_OK")
</pallas_src>

<mosaic_0001>
module attributes {stable_mosaic.version = 11 : i64} {
  func.func @_gemm_affine_kernel(%arg0: i32, %arg1: i32, %arg2: memref<256x128xbf16, #tpu.memory_space<vmem>>, %arg3: memref<1x128x128xbf16, #tpu.memory_space<vmem>>, %arg4: memref<1x1x128xf32, #tpu.memory_space<vmem>>, %arg5: memref<1x1x128xf32, #tpu.memory_space<vmem>>, %arg6: memref<1x1x128xf32, #tpu.memory_space<vmem>>, %arg7: memref<256x128xf32, #tpu.memory_space<vmem>>) attributes {dimension_semantics = [#tpu.dimension_semantics<parallel>, #tpu.dimension_semantics<parallel>], iteration_bounds = array<i64: 2, 1>, scalar_prefetch = 0 : i64, scratch_operands = 0 : i64, tpu.core_type = #tpu.core_type<tc>, window_params = [{transform_indices = @transform_0, window_bounds = array<i64: 256, 128>}, {pipeline_mode = #tpu.pipeline_mode<synchronous>, transform_indices = @transform_1, window_bounds = array<i64: 1, 128, 128>}, {pipeline_mode = #tpu.pipeline_mode<synchronous>, transform_indices = @transform_2, window_bounds = array<i64: 1, 1, 128>}, {pipeline_mode = #tpu.pipeline_mode<synchronous>, transform_indices = @transform_3, window_bounds = array<i64: 1, 1, 128>}, {pipeline_mode = #tpu.pipeline_mode<synchronous>, transform_indices = @transform_4, window_bounds = array<i64: 1, 1, 128>}, {transform_indices = @transform_5, window_bounds = array<i64: 256, 128>}]} {
    %0 = arith.index_cast %arg1 : i32 to index
    %c0 = arith.constant 0 : index
    %c0_0 = arith.constant 0 : index
    %1 = vector.load %arg3[%0, %c0, %c0_0] : memref<1x128x128xbf16, #tpu.memory_space<vmem>>, vector<1x128x128xbf16>
    %2 = vector.shape_cast %1 : vector<1x128x128xbf16> to vector<128x128xbf16>
    %3 = arith.index_cast %arg1 : i32 to index
    %c0_1 = arith.constant 0 : index
    %c0_2 = arith.constant 0 : index
    %4 = vector.load %arg4[%3, %c0_1, %c0_2] : memref<1x1x128xf32, #tpu.memory_space<vmem>>, vector<1x1x128xf32>
    %5 = vector.shape_cast %4 : vector<1x1x128xf32> to vector<1x128xf32>
    %6 = arith.index_cast %arg1 : i32 to index
    %c0_3 = arith.constant 0 : index
    %c0_4 = arith.constant 0 : index
    %7 = vector.load %arg5[%6, %c0_3, %c0_4] : memref<1x1x128xf32, #tpu.memory_space<vmem>>, vector<1x1x128xf32>
    %8 = vector.shape_cast %7 : vector<1x1x128xf32> to vector<1x128xf32>
    %c0_5 = arith.constant 0 : index
    %c0_6 = arith.constant 0 : index
    %9 = vector.load %arg2[%c0_5, %c0_6] : memref<256x128xbf16, #tpu.memory_space<vmem>>, vector<256x128xbf16>
    %cst = arith.constant dense<0.000000e+00> : vector<256x128xf32>
    %10 = tpu.matmul %9, %2, %cst {dimension_numbers = #tpu.dot_dimension_numbers<[1], [0], [0], [1], [0, 0, 1, 1], [], []>} : vector<256x128xbf16>, vector<128x128xbf16>, vector<256x128xf32> -> vector<256x128xf32>
    %11 = vector.broadcast %5 : vector<1x128xf32> to vector<256x128xf32>
    %12 = arith.mulf %10, %11 : vector<256x128xf32>
    %13 = vector.broadcast %8 : vector<1x128xf32> to vector<256x128xf32>
    %14 = arith.addf %12, %13 : vector<256x128xf32>
    %15 = arith.index_cast %arg1 : i32 to index
    %c0_7 = arith.constant 0 : index
    %c0_8 = arith.constant 0 : index
    %16 = vector.load %arg6[%15, %c0_7, %c0_8] : memref<1x1x128xf32, #tpu.memory_space<vmem>>, vector<1x1x128xf32>
    %17 = vector.shape_cast %16 : vector<1x1x128xf32> to vector<1x128xf32>
    %cst_9 = arith.constant 0.000000e+00 : f32
    %18 = vector.broadcast %cst_9 : f32 to vector<256x128xf32>
    %19 = arith.subf %18, %14 : vector<256x128xf32>
    %20 = math.exp %19 : vector<256x128xf32>
    %cst_10 = arith.constant 1.000000e+00 : f32
    %21 = vector.broadcast %cst_10 : f32 to vector<256x128xf32>
    %22 = arith.addf %21, %20 : vector<256x128xf32>
    %23 = tpu.reciprocal %22 {approx = true} : vector<256x128xf32> -> vector<256x128xf32>
    %cst_11 = arith.constant 5.000000e-01 : f32
    %24 = vector.broadcast %cst_11 : f32 to vector<1x128xf32>
    %25 = arith.cmpf ogt, %17, %24 : vector<1x128xf32>
    %26 = vector.shape_cast %25 : vector<1x128xi1> to vector<1x128xi1>
    %27 = vector.broadcast %26 : vector<1x128xi1> to vector<256x128xi1>
    %28 = arith.select %27, %23, %14 : vector<256x128xi1>, vector<256x128xf32>
    %c0_12 = arith.constant 0 : index
    %c0_13 = arith.constant 0 : index
    %29 = vector.load %arg7[%c0_12, %c0_13] : memref<256x128xf32, #tpu.memory_space<vmem>>, vector<256x128xf32>
    tpu.vector_store %arg7[%c0_12, %c0_13], %28 {strides = array<i32>} : memref<256x128xf32, #tpu.memory_space<vmem>>, vector<256x128xf32>,
    return
  }
  func.func @transform_0(%arg0: i32, %arg1: i32) -> (i32, i32) {
    %c0_i32 = arith.constant 0 : i32
    %c0_i32_0 = arith.constant 0 : i32
    return %arg0, %c0_i32 : i32, i32
  }
  func.func @transform_1(%arg0: i32, %arg1: i32) -> (i32, i32, i32) {
    %c0_i32 = arith.constant 0 : i32
    %c0_i32_0 = arith.constant 0 : i32
    %c0_i32_1 = arith.constant 0 : i32
    %c0_i32_2 = arith.constant 0 : i32
    return %c0_i32, %c0_i32_0, %c0_i32_1 : i32, i32, i32
  }
  func.func @transform_2(%arg0: i32, %arg1: i32) -> (i32, i32, i32) {
    %c0_i32 = arith.constant 0 : i32
    %c0_i32_0 = arith.constant 0 : i32
    %c0_i32_1 = arith.constant 0 : i32
    %c0_i32_2 = arith.constant 0 : i32
    return %c0_i32, %c0_i32_0, %c0_i32_1 : i32, i32, i32
  }
  func.func @transform_3(%arg0: i32, %arg1: i32) -> (i32, i32, i32) {
    %c0_i32 = arith.constant 0 : i32
    %c0_i32_0 = arith.constant 0 : i32
    %c0_i32_1 = arith.constant 0 : i32
    %c0_i32_2 = arith.constant 0 : i32
    return %c0_i32, %c0_i32_0, %c0_i32_1 : i32, i32, i32
  }
  func.func @transform_4(%arg0: i32, %arg1: i32) -> (i32, i32, i32) {
    %c0_i32 = arith.constant 0 : i32
    %c0_i32_0 = arith.constant 0 : i32
    %c0_i32_1 = arith.constant 0 : i32
    %c0_i32_2 = arith.constant 0 : i32
    return %c0_i32, %c0_i32_0, %c0_i32_1 : i32, i32, i32
  }
  func.func @transform_5(%arg0: i32, %arg1: i32) -> (i32, i32) {
    %c0_i32 = arith.constant 0 : i32
    return %arg0, %arg1 : i32, i32
  }
}

module attributes {stable_mosaic.version = 11 : i64} {
  func.func @_gemm_affine_kernel(%arg0: i32, %arg1: i32, %arg2: memref<256x128xbf16, #tpu.memory_space<vmem>>, %arg3: memref<1x128x128xbf16, #tpu.memory_space<vmem>>, %arg4: memref<1x1x128xf32, #tpu.memory_space<vmem>>, %arg5: memref<1x1x128xf32, #tpu.memory_space<vmem>>, %arg6: memref<1x1x128xf32, #tpu.memory_space<vmem>>, %arg7: memref<256x128xbf16, #tpu.memory_space<vmem>>) attributes {dimension_semantics = [#tpu.dimension_semantics<parallel>, #tpu.dimension_semantics<parallel>], iteration_bounds = array<i64: 2, 1>, scalar_prefetch = 0 : i64, scratch_operands = 0 : i64, tpu.core_type = #tpu.core_type<tc>, window_params = [{transform_indices = @transform_0, window_bounds = array<i64: 256, 128>}, {pipeline_mode = #tpu.pipeline_mode<synchronous>, transform_indices = @transform_1, window_bounds = array<i64: 1, 128, 128>}, {pipeline_mode = #tpu.pipeline_mode<synchronous>, transform_indices = @transform_2, window_bounds = array<i64: 1, 1, 128>}, {pipeline_mode = #tpu.pipeline_mode<synchronous>, transform_indices = @transform_3, window_bounds = array<i64: 1, 1, 128>}, {pipeline_mode = #tpu.pipeline_mode<synchronous>, transform_indices = @transform_4, window_bounds = array<i64: 1, 1, 128>}, {transform_indices = @transform_5, window_bounds = array<i64: 256, 128>}]} {
    %0 = arith.index_cast %arg1 : i32 to index
    %c0 = arith.constant 0 : index
    %c0_0 = arith.constant 0 : index
    %1 = vector.load %arg3[%0, %c0, %c0_0] : memref<1x128x128xbf16, #tpu.memory_space<vmem>>, vector<1x128x128xbf16>
    %2 = vector.shape_cast %1 : vector<1x128x128xbf16> to vector<128x128xbf16>
    %3 = arith.index_cast %arg1 : i32 to index
    %c0_1 = arith.constant 0 : index
    %c0_2 = arith.constant 0 : index
    %4 = vector.load %arg4[%3, %c0_1, %c0_2] : memref<1x1x128xf32, #tpu.memory_space<vmem>>, vector<1x1x128xf32>
    %5 = vector.shape_cast %4 : vector<1x1x128xf32> to vector<1x128xf32>
    %6 = arith.index_cast %arg1 : i32 to index
    %c0_3 = arith.constant 0 : index
    %c0_4 = arith.constant 0 : index
    %7 = vector.load %arg5[%6, %c0_3, %c0_4] : memref<1x1x128xf32, #tpu.memory_space<vmem>>, vector<1x1x128xf32>
    %8 = vector.shape_cast %7 : vector<1x1x128xf32> to vector<1x128xf32>
    %c0_5 = arith.constant 0 : index
    %c0_6 = arith.constant 0 : index
    %9 = vector.load %arg2[%c0_5, %c0_6] : memref<256x128xbf16, #tpu.memory_space<vmem>>, vector<256x128xbf16>
    %cst = arith.constant dense<0.000000e+00> : vector<256x128xf32>
    %10 = tpu.matmul %9, %2, %cst {dimension_numbers = #tpu.dot_dimension_numbers<[1], [0], [0], [1], [0, 0, 1, 1], [], []>} : vector<256x128xbf16>, vector<128x128xbf16>, vector<256x128xf32> -> vector<256x128xf32>
    %11 = vector.broadcast %5 : vector<1x128xf32> to vector<256x128xf32>
    %12 = arith.mulf %10, %11 : vector<256x128xf32>
    %13 = vector.broadcast %8 : vector<1x128xf32> to vector<256x128xf32>
    %14 = arith.addf %12, %13 : vector<256x128xf32>
    %cst_7 = arith.constant 0.000000e+00 : f32
    %15 = vector.broadcast %cst_7 : f32 to vector<256x128xf32>
    %16 = arith.maximumf %14, %15 : vector<256x128xf32>
    %17 = arith.truncf %16 : vector<256x128xf32> to vector<256x128xbf16>
    %c0_8 = arith.constant 0 : index
    %c0_9 = arith.constant 0 : index
    %18 = vector.load %arg7[%c0_8, %c0_9] : memref<256x128xbf16, #tpu.memory_space<vmem>>, vector<256x128xbf16>
    tpu.vector_store %arg7[%c0_8, %c0_9], %17 {strides = array<i32>} : memref<256x128xbf16, #tpu.memory_space<vmem>>, vector<256x128xbf16>,
    return
  }
  func.func @transform_0(%arg0: i32, %arg1: i32) -> (i32, i32) {
    %c0_i32 = arith.constant 0 : i32
    %c0_i32_0 = arith.constant 0 : i32
    return %arg0, %c0_i32 : i32, i32
  }
  func.func @transform_1(%arg0: i32, %arg1: i32) -> (i32, i32, i32) {
    %c0_i32 = arith.constant 0 : i32
    %c0_i32_0 = arith.constant 0 : i32
    %c0_i32_1 = arith.constant 0 : i32
    %c0_i32_2 = arith.constant 0 : i32
    return %c0_i32, %c0_i32_0, %c0_i32_1 : i32, i32, i32
  }
  func.func @transform_2(%arg0: i32, %arg1: i32) -> (i32, i32, i32) {
    %c0_i32 = arith.constant 0 : i32
    %c0_i32_0 = arith.constant 0 : i32
    %c0_i32_1 = arith.constant 0 : i32
    %c0_i32_2 = arith.constant 0 : i32
    return %c0_i32, %c0_i32_0, %c0_i32_1 : i32, i32, i32
  }
  func.func @transform_3(%arg0: i32, %arg1: i32) -> (i32, i32, i32) {
    %c0_i32 = arith.constant 0 : i32
    %c0_i32_0 = arith.constant 0 : i32
    %c0_i32_1 = arith.constant 0 : i32
    %c0_i32_2 = arith.constant 0 : i32
    return %c0_i32, %c0_i32_0, %c0_i32_1 : i32, i32, i32
  }
  func.func @transform_4(%arg0: i32, %arg1: i32) -> (i32, i32, i32) {
    %c0_i32 = arith.constant 0 : i32
    %c0_i32_0 = arith.constant 0 : i32
    %c0_i32_1 = arith.constant 0 : i32
    %c0_i32_2 = arith.constant 0 : i32
    return %c0_i32, %c0_i32_0, %c0_i32_1 : i32, i32, i32
  }
  func.func @transform_5(%arg0: i32, %arg1: i32) -> (i32, i32) {
    %c0_i32 = arith.constant 0 : i32
    return %arg0, %arg1 : i32, i32
  }
}

</mosaic_0001>

<llo_original>
// kernel: deform_conv_forward.2
$region0: #{deform_conv_forward.2}
  #allocation0 [shape = 'u32[]', space=smem, size = 0x4, offset = 0x4, fixed_abs, tag = 'smem constant byte address 0x4 - core index']
  #allocation1 [shape = 'u32[144,128]{1,0:T(1,128)}', space=vmem, size = 0x12000, scoped, tag = 'internal scratch']
  %s0 = inlined_call_operand.vmem [shape: bf16[512,128], index: 0, kind: input, shape index: {}]
  %s1 = inlined_call_operand.vmem [shape: bf16[1,128,128], index: 1, kind: input, shape index: {}]
  %s2 = inlined_call_operand.vmem [shape: f32[1,1,128], index: 2, kind: input, shape index: {}]
  %s3 = inlined_call_operand.vmem [shape: f32[1,1,128], index: 3, kind: input, shape index: {}]
  %s4 = inlined_call_operand.vmem [shape: f32[1,1,128], index: 4, kind: input, shape index: {}]
  %s5 = inlined_call_operand.vmem [shape: f32[512,128], index: 5, kind: output, shape index: {}]
  %s6 = sld [smem:[#allocation0]]
  $region53: #{deform_conv_forward.2} parent=0
    _
  %s8 = ssub.s32 1, %s6
  %s9 = scalar_select 0, %s8, %s6
  loop: start=0, step=1, limit=4
  $region2: #{deform_conv_forward.2} parent=0 // loop_pre_header
    _
  $region3: #{deform_conv_forward.2} parent=0 // loop_header
    %s11 = sphi 0, %s15
    %p12 = scmp.ge.s32.totalorder %s11, 4
    %s18 = sphi 0, %s30
    %s19 = sphi 0, %s26
    %s20 = sphi 0, %s18
    %s21 = sphi 0, %s19
    %s22 = sphi 0, %s20
    %s23 = sphi 0, %s21
    %s33 = sphi 0, %s35
    %s36 = sphi 0, %s33
    %s37 = sphi 0, %s36
    %s53 = sphi 0, %s37
    %s57 = sphi 0, %s57
    %s59 = sphi 0, %s57
    %s60 = sphi 0, %s59
    %s74 = sphi 0, %s60
    %s78 = sphi 0, %s78
    %s80 = sphi 0, %s78
    %s81 = sphi 0, %s80
    %s95 = sphi 0, %s81
    %s99 = sphi 0, %s99
    %s101 = sphi 0, %s99
    %s102 = sphi 0, %s101
    %s116 = sphi 0, %s102
    %s120 = sphi 0, %s120
    %s122 = sphi 0, %s120
    %s123 = sphi 0, %s122
    %s137 = sphi 0, %s123
    %s145 = sphi 0, %s147
    %s148 = sphi 0, %s145
    %s149 = sphi 0, %s148
    %s165 = sphi 0, %s149
  $region4: #{deform_conv_forward.2} parent=0 // loop_header_branch
    %14 = sbr.rel (%p12) target = $region8
  $region5: #{deform_conv_forward.2} parent=0 // loop_body
    %s16 = ssub.s32 %s11, 1
    %s17 = ssub.s32 %s11, 2
    %s24 = sadd.s32 1, %s19
    %p25 = scmp.ge.s32.totalorder %s24, 1
    %s26 = scalar_select %p25, 0, %s24
    %s27 = sadd.s32 1, %s18
    %s28 = scalar_select %p25, %s27, %s18
    %p29 = scmp.ge.s32.totalorder %s28, 2
    %s30 = scalar_select %p29, 0, %s28
    %s31 = ssub.s32 %s18, %s30
    %p32 = scmp.eq.s32.totalorder %s31, 0
    %s34 = sadd.s32 %s33, 1
    %s35 = scalar_select %p32, %s33, %s34
    %p38 = pneg %p32
    %p39 = scmp.eq.s32.totalorder %s11, 1
    %p40 = por %p38, %p39
    %p41 = scmp.ne.s32.totalorder %s33, %s36
    %p42 = scmp.eq.s32.totalorder %s11, 0
    %p43 = por %p41, %p42
    %p44 = scmp.ne.s32.totalorder %s33, %s36
    %p45 = scmp.eq.s32.totalorder %s16, 1
    %p46 = por %p44, %p45
    %p47 = scmp.ne.s32.totalorder %s36, %s37
    %p48 = scmp.eq.s32.totalorder %s16, 0
    %p49 = por %p47, %p48
    %p50 = scmp.ne.s32.totalorder %s36, %s37
    %p51 = scmp.eq.s32.totalorder %s17, 1
    %p52 = por %p50, %p51
    %p54 = scmp.ne.s32.totalorder %s37, %s53
    %p55 = scmp.eq.s32.totalorder %s17, 0
    %p56 = por %p54, %p55
    %s58 = sadd.s32 %s57, 1
    %p61 = scmp.eq.s32.totalorder %s11, 1
    %p62 = scmp.ne.s32.totalorder %s57, %s59
    %p63 = scmp.eq.s32.totalorder %s11, 0
    %p64 = por %p62, %p63
    %p65 = scmp.ne.s32.totalorder %s57, %s59
    %p66 = scmp.eq.s32.totalorder %s16, 1
    %p67 = por %p65, %p66
    %p68 = scmp.ne.s32.totalorder %s59, %s60
    %p69 = scmp.eq.s32.totalorder %s16, 0
    %p70 = por %p68, %p69
    %p71 = scmp.ne.s32.totalorder %s59, %s60
    %p72 = scmp.eq.s32.totalorder %s17, 1
    %p73 = por %p71, %p72
    %p75 = scmp.ne.s32.totalorder %s60, %s74
    %p76 = scmp.eq.s32.totalorder %s17, 0
    %p77 = por %p75, %p76
    %s79 = sadd.s32 %s78, 1
    %p82 = scmp.eq.s32.totalorder %s11, 1
    %p83 = scmp.ne.s32.totalorder %s78, %s80
    %p84 = scmp.eq.s32.totalorder %s11, 0
    %p85 = por %p83, %p84
    %p86 = scmp.ne.s32.totalorder %s78, %s80
    %p87 = scmp.eq.s32.totalorder %s16, 1
    %p88 = por %p86, %p87
    %p89 = scmp.ne.s32.totalorder %s80, %s81
    %p90 = scmp.eq.s32.totalorder %s16, 0
    %p91 = por %p89, %p90
    %p92 = scmp.ne.s32.totalorder %s80, %s81
    %p93 = scmp.eq.s32.totalorder %s17, 1
    %p94 = por %p92, %p93
    %p96 = scmp.ne.s32.totalorder %s81, %s95
    %p97 = scmp.eq.s32.totalorder %s17, 0
    %p98 = por %p96, %p97
    %s100 = sadd.s32 %s99, 1
    %p103 = scmp.eq.s32.totalorder %s11, 1
    %p104 = scmp.ne.s32.totalorder %s99, %s101
    %p105 = scmp.eq.s32.totalorder %s11, 0
    %p106 = por %p104, %p105
    %p107 = scmp.ne.s32.totalorder %s99, %s101
    %p108 = scmp.eq.s32.totalorder %s16, 1
    %p109 = por %p107, %p108
    %p110 = scmp.ne.s32.totalorder %s101, %s102
    %p111 = scmp.eq.s32.totalorder %s16, 0
    %p112 = por %p110, %p111
    %p113 = scmp.ne.s32.totalorder %s101, %s102
    %p114 = scmp.eq.s32.totalorder %s17, 1
    %p115 = por %p113, %p114
    %p117 = scmp.ne.s32.totalorder %s102, %s116
    %p118 = scmp.eq.s32.totalorder %s17, 0
    %p119 = por %p117, %p118
    %s121 = sadd.s32 %s120, 1
    %p124 = scmp.eq.s32.totalorder %s11, 1
    %p125 = scmp.ne.s32.totalorder %s120, %s122
    %p126 = scmp.eq.s32.totalorder %s11, 0
    %p127 = por %p125, %p126
    %p128 = scmp.ne.s32.totalorder %s120, %s122
    %p129 = scmp.eq.s32.totalorder %s16, 1
    %p130 = por %p128, %p129
    %p131 = scmp.ne.s32.totalorder %s122, %s123
    %p132 = scmp.eq.s32.totalorder %s16, 0
    %p133 = por %p131, %p132
    %p134 = scmp.ne.s32.totalorder %s122, %s123
    %p135 = scmp.eq.s32.totalorder %s17, 1
    %p136 = por %p134, %p135
    %p138 = scmp.ne.s32.totalorder %s123, %s137
    %p139 = scmp.eq.s32.totalorder %s17, 0
    %p140 = por %p138, %p139
    %s141 = ssub.s32 %s18, %s30
    %s142 = ssub.s32 %s19, %s26
    %s143 = sor.u32 %s141, %s142
    %p144 = scmp.eq.s32.totalorder %s143, 0
    %s146 = sadd.s32 %s145, 1
    %s147 = scalar_select %p144, %s145, %s146
    %p150 = pneg %p144
    %p151 = scmp.eq.s32.totalorder %s11, 1
    %p152 = por %p150, %p151
    %p153 = scmp.ne.s32.totalorder %s145, %s148
    %p154 = scmp.eq.s32.totalorder %s11, 0
    %p155 = por %p153, %p154
    %p156 = scmp.ne.s32.totalorder %s145, %s148
    %p157 = scmp.eq.s32.totalorder %s16, 1
    %p158 = por %p156, %p157
    %p159 = scmp.ne.s32.totalorder %s148, %s149
    %p160 = scmp.eq.s32.totalorder %s16, 0
    %p161 = por %p159, %p160
    %p162 = scmp.ne.s32.totalorder %s148, %s149
    %p163 = scmp.eq.s32.totalorder %s17, 1
    %p164 = por %p162, %p163
    %p166 = scmp.ne.s32.totalorder %s149, %s165
    %p167 = scmp.eq.s32.totalorder %s17, 0
    %p168 = por %p166, %p167
    %p169 = scmp.le.s32.totalorder 1, %s11
    %p170 = scmp.lt.s32.totalorder %s11, 3
    %p171 = pnand %p169, %p170
    %p172 = pneg %p171
    // Predicated region
    $region9: #{deform_conv_forward.2} parent=5 // pred_check
      _
    $region10: #{deform_conv_forward.2} parent=5 // pred_check_branch
      %174 = sbr.rel (%p171) target = $region12
    $region11: #{deform_conv_forward.2} parent=5 // pred_region
      %s175 = ssub.s32 %s11, 1
      // Predicated region
      $region13: #{deform_conv_forward.2} parent=11 // pred_check
        %p176 = pneg %p70
      $region14: #{deform_conv_forward.2} parent=11 // pred_check_branch
        %178 = sbr.rel (%p176) target = $region16
      $region15: #{deform_conv_forward.2} parent=11 // pred_region
        _
      $region16: #{deform_conv_forward.2} parent=11 // pred_fallthru
        _
      // Predicated region
      $region17: #{deform_conv_forward.2} parent=11 // pred_check
        %p179 = pneg %p91
      $region18: #{deform_conv_forward.2} parent=11 // pred_check_branch
        %181 = sbr.rel (%p179) target = $region20
      $region19: #{deform_conv_forward.2} parent=11 // pred_region
        _
      $region20: #{deform_conv_forward.2} parent=11 // pred_fallthru
        _
      // Predicated region
      $region21: #{deform_conv_forward.2} parent=11 // pred_check
        %p182 = pneg %p112
      $region22: #{deform_conv_forward.2} parent=11 // pred_check_branch
        %184 = sbr.rel (%p182) target = $region24
      $region23: #{deform_conv_forward.2} parent=11 // pred_region
        _
      $region24: #{deform_conv_forward.2} parent=11 // pred_fallthru
        _
      // Predicated region
      $region25: #{deform_conv_forward.2} parent=11 // pred_check
        %p185 = pneg %p133
      $region26: #{deform_conv_forward.2} parent=11 // pred_check_branch
        %187 = sbr.rel (%p185) target = $region28
      $region27: #{deform_conv_forward.2} parent=11 // pred_region
        _
      $region28: #{deform_conv_forward.2} parent=11 // pred_fallthru
        _
    $region12: #{deform_conv_forward.2} parent=5 // pred_fallthru
      _
    %p188 = scmp.lt.s32.totalorder %s11, 2
    // Predicated region
    $region29: #{deform_conv_forward.2} parent=5 // pred_check
      %p189 = pneg %p188
    $region30: #{deform_conv_forward.2} parent=5 // pred_check_branch
      %191 = sbr.rel (%p189) target = $region32
    $region31: #{deform_conv_forward.2} parent=5 // pred_region
      // Predicated region
      $region33: #{deform_conv_forward.2} parent=31 // pred_check
        %p192 = pneg %p43
      $region34: #{deform_conv_forward.2} parent=31 // pred_check_branch
        %194 = sbr.rel (%p192) target = $region36
      $region35: #{deform_conv_forward.2} parent=31 // pred_region
        %s195 = smul.u32 32, %s18
        %p196 = scmp.lt.s32.totalorder %s195, 63
        %s197 = scalar_select %p196, %s195, 63
        %s198 = smul.addr %s197, 4
        %s199 = scalar_lea.vmem %s0, %s198
        %s200 = smul.u32 32, %s18
      $region36: #{deform_conv_forward.2} parent=31 // pred_fallthru
        _
    $region32: #{deform_conv_forward.2} parent=5 // pred_fallthru
      _
    %p201 = scmp.le.s32.totalorder 1, %s11
    %p202 = scmp.lt.s32.totalorder %s11, 3
    %p203 = pnand %p201, %p202
    %p204 = pneg %p203
    // Predicated region
    $region37: #{deform_conv_forward.2} parent=5 // pred_check
      _
    $region38: #{deform_conv_forward.2} parent=5 // pred_check_branch
      %206 = sbr.rel (%p203) target = $region40
    $region39: #{deform_conv_forward.2} parent=5 // pred_region
      %s207 = ssub.s32 %s11, 1
      %s208 = smul.u32 32, %s20
      %p209 = scmp.lt.s32.totalorder %s208, 63
      %s210 = scalar_select %p209, %s208, 63
      %s211 = smul.addr %s210, 4
      %s212 = scalar_lea.vmem %s0, %s211
      %p213 = pneg %p49
      %p214 = pneg %p46
      %p215 = pneg %p70
      %p216 = pneg %p67
      %p217 = pneg %p91
      %p218 = pneg %p88
      %p219 = pneg %p112
      %p220 = pneg %p109
      %p221 = pneg %p133
      %p222 = pneg %p130
      %p223 = pneg %p161
      %p224 = pneg %p158
      %s225 = smul.u32 32, %s20
      %p226 = scmp.lt.s32.totalorder %s225, 63
      %s227 = scalar_select %p226, %s225, 63
      %p228 = scmp.lt.s32.totalorder %s21, 0
      %s229 = scalar_select %p228, %s21, 0
      %s230 = sadd.s32 %s229, %s227
      %s231 = smul.addr %s230, 8
      %s232 = scalar_lea.vmem %s5, %s231
      %s233 = smul.u32 32, %s20
      %p234 = scmp.lt.s32.totalorder %s233, 63
      %s235 = scalar_select %p234, %s233, 63
      %s236 = smul.addr %s235, 4
      %s237 = scalar_lea.vmem %s0, %s236
      %s238 = smul.u32 32, %s20
      %s239 = smul.u32 32, %s20
      %p240 = scmp.lt.s32.totalorder %s239, 63
      %s241 = scalar_select %p240, %s239, 63
      %p242 = scmp.lt.s32.totalorder %s21, 0
      %s243 = scalar_select %p242, %s21, 0
      %s244 = sadd.s32 %s243, %s241
      %s245 = smul.addr %s244, 8
      %s246 = scalar_lea.vmem %s5, %s245
      %s247 = smul.u32 32, %s20
      %s249 = smul.u32 %s21, 16
      %s250 = smul.addr %s249, 4
      %s251 = scalar_lea.vmem %s1, %s250
      %v252 = vld [vmem:[%s251] sm:$0xf]
      %v253 = vld [vmem:[%s251 + $0x4] sm:$0xf]
      %v254 = vld [vmem:[%s251 + $0x8] sm:$0xf]
      %v255 = vld [vmem:[%s251 + $0xc] sm:$0xf]
      %v256 = vld [vmem:[%s251 + $0x10] sm:$0xf]
      %v257 = vld [vmem:[%s251 + $0x14] sm:$0xf]
      %v258 = vld [vmem:[%s251 + $0x18] sm:$0xf]
      %v259 = vld [vmem:[%s251 + $0x1c] sm:$0xf]
      %v260 = vld [vmem:[%s251 + $0x20] sm:$0xf]
      %v261 = vld [vmem:[%s251 + $0x24] sm:$0xf]
      %v262 = vld [vmem:[%s251 + $0x28] sm:$0xf]
      %v263 = vld [vmem:[%s251 + $0x2c] sm:$0xf]
      %v264 = vld [vmem:[%s251 + $0x30] sm:$0xf]
      %v265 = vld [vmem:[%s251 + $0x34] sm:$0xf]
      %v266 = vld [vmem:[%s251 + $0x38] sm:$0xf]
      %v267 = vld [vmem:[%s251 + $0x3c] sm:$0xf]
      %s268 = scalar_lea.vmem %s2, %s21
      %v269 = vld [vmem:[%s268] sm:$0x1]
      %s270 = scalar_lea.vmem %s3, %s21
      %v271 = vld [vmem:[%s270] sm:$0x1]
      %v272 = vld [vmem:[%s237] sm:$0xf]
      %v273 = vld [vmem:[%s237 + $0x4] sm:$0xf]
      %v274 = vld [vmem:[%s237 + $0x8] sm:$0xf]
      %v275 = vld [vmem:[%s237 + $0xc] sm:$0xf]
      %v276 = vld [vmem:[%s237 + $0x10] sm:$0xf]
      %v277 = vld [vmem:[%s237 + $0x14] sm:$0xf]
      %v278 = vld [vmem:[%s237 + $0x18] sm:$0xf]
      %v279 = vld [vmem:[%s237 + $0x1c] sm:$0xf]
      %v280 = vld [vmem:[%s237 + $0x20] sm:$0xf]
      %v281 = vld [vmem:[%s237 + $0x24] sm:$0xf]
      %v282 = vld [vmem:[%s237 + $0x28] sm:$0xf]
      %v283 = vld [vmem:[%s237 + $0x2c] sm:$0xf]
      %v284 = vld [vmem:[%s237 + $0x30] sm:$0xf]
      %v285 = vld [vmem:[%s237 + $0x34] sm:$0xf]
      %v286 = vld [vmem:[%s237 + $0x38] sm:$0xf]
      %v287 = vld [vmem:[%s237 + $0x3c] sm:$0xf]
      %v288 = vld [vmem:[%s237 + $0x40] sm:$0xf]
      %v289 = vld [vmem:[%s237 + $0x44] sm:$0xf]
      %v290 = vld [vmem:[%s237 + $0x48] sm:$0xf]
      %v291 = vld [vmem:[%s237 + $0x4c] sm:$0xf]
      %v292 = vld [vmem:[%s237 + $0x50] sm:$0xf]
      %v293 = vld [vmem:[%s237 + $0x54] sm:$0xf]
      %v294 = vld [vmem:[%s237 + $0x58] sm:$0xf]
      %v295 = vld [vmem:[%s237 + $0x5c] sm:$0xf]
      %v296 = vld [vmem:[%s237 + $0x60] sm:$0xf]
      %v297 = vld [vmem:[%s237 + $0x64] sm:$0xf]
      %v298 = vld [vmem:[%s237 + $0x68] sm:$0xf]
      %v299 = vld [vmem:[%s237 + $0x6c] sm:$0xf]
      %v300 = vld [vmem:[%s237 + $0x70] sm:$0xf]
      %v301 = vld [vmem:[%s237 + $0x74] sm:$0xf]
      %v302 = vld [vmem:[%s237 + $0x78] sm:$0xf]
      %v303 = vld [vmem:[%s237 + $0x7c] sm:$0xf]
      %v336 = vunpack.c.l.b16 %v272
      %v337 = vunpack.c.l.b16 %v273
      %v338 = vunpack.c.l.b16 %v274
      %v339 = vunpack.c.l.b16 %v275
      %v340 = vunpack.c.l.b16 %v276
      %v341 = vunpack.c.l.b16 %v277
      %v342 = vunpack.c.l.b16 %v278
      %v343 = vunpack.c.l.b16 %v279
      %v344 = vunpack.c.l.b16 %v280
      %v345 = vunpack.c.l.b16 %v281
      %v346 = vunpack.c.l.b16 %v282
      %v347 = vunpack.c.l.b16 %v283
      %v348 = vunpack.c.l.b16 %v284
      %v349 = vunpack.c.l.b16 %v285
      %v350 = vunpack.c.l.b16 %v286
      %v351 = vunpack.c.l.b16 %v287
      %v352 = vunpack.c.l.b16 %v288
      %v353 = vunpack.c.l.b16 %v289
      %v354 = vunpack.c.l.b16 %v290
      %v355 = vunpack.c.l.b16 %v291
      %v356 = vunpack.c.l.b16 %v292
      %v357 = vunpack.c.l.b16 %v293
      %v358 = vunpack.c.l.b16 %v294
      %v359 = vunpack.c.l.b16 %v295
      %v360 = vunpack.c.l.b16 %v296
      %v361 = vunpack.c.l.b16 %v297
      %v362 = vunpack.c.l.b16 %v298
      %v363 = vunpack.c.l.b16 %v299
      %v364 = vunpack.c.l.b16 %v300
      %v365 = vunpack.c.l.b16 %v301
      %v366 = vunpack.c.l.b16 %v302
      %v367 = vunpack.c.l.b16 %v303
      %v368 = vpack.c.b16 %v337, %v336
      %v369 = vpack.c.b16 %v339, %v338
      %v370 = vpack.c.b16 %v341, %v340
      %v371 = vpack.c.b16 %v343, %v342
      %v372 = vpack.c.b16 %v345, %v344
      %v373 = vpack.c.b16 %v347, %v346
      %v374 = vpack.c.b16 %v349, %v348
      %v375 = vpack.c.b16 %v351, %v350
      %v376 = vpack.c.b16 %v353, %v352
      %v377 = vpack.c.b16 %v355, %v354
      %v378 = vpack.c.b16 %v357, %v356
      %v379 = vpack.c.b16 %v359, %v358
      %v380 = vpack.c.b16 %v361, %v360
      %v381 = vpack.c.b16 %v363, %v362
      %v382 = vpack.c.b16 %v365, %v364
      %v383 = vpack.c.b16 %v367, %v366
      %v416 = vunpack.c.l.b16 %v252
      %v417 = vunpack.c.l.b16 %v253
      %v418 = vunpack.c.l.b16 %v254
      %v419 = vunpack.c.l.b16 %v255
      %v420 = vunpack.c.l.b16 %v256
      %v421 = vunpack.c.l.b16 %v257
      %v422 = vunpack.c.l.b16 %v258
      %v423 = vunpack.c.l.b16 %v259
      %v424 = vunpack.c.l.b16 %v260
      %v425 = vunpack.c.l.b16 %v261
      %v426 = vunpack.c.l.b16 %v262
      %v427 = vunpack.c.l.b16 %v263
      %v428 = vunpack.c.l.b16 %v264
      %v429 = vunpack.c.l.b16 %v265
      %v430 = vunpack.c.l.b16 %v266
      %v431 = vunpack.c.l.b16 %v267
      %v432 = vpack.c.b16 %v417, %v416
      %v433 = vpack.c.b16 %v419, %v418
      %v434 = vpack.c.b16 %v421, %v420
      %v435 = vpack.c.b16 %v423, %v422
      %v436 = vpack.c.b16 %v425, %v424
      %v437 = vpack.c.b16 %v427, %v426
      %v438 = vpack.c.b16 %v429, %v428
      %v439 = vpack.c.b16 %v431, %v430
      %448 = vmatprep.subr.bf16.mxu0 0
      %449 = vmatpush1.bf16.msra.mxu0 %v432
      %450 = vmatprep.subr.bf16.mxu0 0
      %451 = vmatpush1.bf16.msra.mxu0 %v433
      %452 = vmatprep.subr.bf16.mxu0 0
      %453 = vmatpush1.bf16.msra.mxu0 %v434
      %454 = vmatprep.subr.bf16.mxu0 0
      %455 = vmatpush1.bf16.msra.mxu0 %v435
      %456 = vmatprep.subr.bf16.mxu0 0
      %457 = vmatpush1.bf16.msra.mxu0 %v436
      %458 = vmatprep.subr.bf16.mxu0 0
      %459 = vmatpush1.bf16.msra.mxu0 %v437
      %460 = vmatprep.subr.bf16.mxu0 0
      %461 = vmatpush1.bf16.msra.mxu0 %v438
      %462 = vmatprep.subr.bf16.mxu0 0
      %463 = vmatpush1.bf16.msra.mxu0 %v439
      %464 = vmatprep.subr.bf16.mxu0 0
      %465 = vmatpush1.bf16.msra.mxu0 0
      %466 = vmatprep.subr.bf16.mxu0 0
      %467 = vmatpush1.bf16.msra.mxu0 0
      %468 = vmatprep.subr.bf16.mxu0 0
      %469 = vmatpush1.bf16.msra.mxu0 0
      %470 = vmatprep.subr.bf16.mxu0 0
      %471 = vmatpush1.bf16.msra.mxu0 0
      %472 = vmatprep.subr.bf16.mxu0 0
      %473 = vmatpush1.bf16.msra.mxu0 0
      %474 = vmatprep.subr.bf16.mxu0 0
      %475 = vmatpush1.bf16.msra.mxu0 0
      %476 = vmatprep.subr.bf16.mxu0 0
      %477 = vmatpush1.bf16.msra.mxu0 0
      %478 = vmatprep.subr.bf16.mxu0 0
      %479 = vmatpush1.bf16.msra.mxu0 0
      %480 = vmatprep.mubr.bf16.mxu0 0
      %481 = vmatmul.mubr.bf16.gmra.mrb[0].mxu0 %v368
      %v482 = vpop.f32.mrb[0].mxu0
      %v483 = vadd.f32 0.0, %v482
      %v484 = vpop.f32.mrb[0].mxu0
      %v485 = vpop.f32.mrb[0].mxu0
      %v486 = vadd.f32 0.0, %v485
      %v487 = vpop.f32.mrb[0].mxu0
      %488 = vmatprep.mubr.bf16.mxu0 0
      %489 = vmatmul.mubr.bf16.gmra.mrb[0].mxu0 %v369
      %v490 = vpop.f32.mrb[0].mxu0
      %v491 = vadd.f32 0.0, %v490
      %v492 = vpop.f32.mrb[0].mxu0
      %v493 = vpop.f32.mrb[0].mxu0
      %v494 = vadd.f32 0.0, %v493
      %v495 = vpop.f32.mrb[0].mxu0
      %496 = vmatprep.mubr.bf16.mxu0 0
      %497 = vmatmul.mubr.bf16.gmra.mrb[0].mxu0 %v370
      %v498 = vpop.f32.mrb[0].mxu0
      %v499 = vadd.f32 0.0, %v498
      %v500 = vpop.f32.mrb[0].mxu0
      %v501 = vpop.f32.mrb[0].mxu0
      %v502 = vadd.f32 0.0, %v501
      %v503 = vpop.f32.mrb[0].mxu0
      %504 = vmatprep.mubr.bf16.mxu0 0
      %505 = vmatmul.mubr.bf16.gmra.mrb[0].mxu0 %v371
      %v506 = vpop.f32.mrb[0].mxu0
      %v507 = vadd.f32 0.0, %v506
      %v508 = vpop.f32.mrb[0].mxu0
      %v509 = vpop.f32.mrb[0].mxu0
      %v510 = vadd.f32 0.0, %v509
      %v511 = vpop.f32.mrb[0].mxu0
      %512 = vmatprep.mubr.bf16.mxu0 0
      %513 = vmatmul.mubr.bf16.gmra.mrb[0].mxu0 %v372
      %v514 = vpop.f32.mrb[0].mxu0
      %v515 = vadd.f32 0.0, %v514
      %v516 = vpop.f32.mrb[0].mxu0
      %v517 = vpop.f32.mrb[0].mxu0
      %v518 = vadd.f32 0.0, %v517
      %v519 = vpop.f32.mrb[0].mxu0
      %520 = vmatprep.mubr.bf16.mxu0 0
      %521 = vmatmul.mubr.bf16.gmra.mrb[0].mxu0 %v373
      %v522 = vpop.f32.mrb[0].mxu0
      %v523 = vadd.f32 0.0, %v522
      %v524 = vpop.f32.mrb[0].mxu0
      %v525 = vpop.f32.mrb[0].mxu0
      %v526 = vadd.f32 0.0, %v525
      %v527 = vpop.f32.mrb[0].mxu0
      %528 = vmatprep.mubr.bf16.mxu0 0
      %529 = vmatmul.mubr.bf16.gmra.mrb[0].mxu0 %v374
      %v530 = vpop.f32.mrb[0].mxu0
      %v531 = vadd.f32 0.0, %v530
      %v532 = vpop.f32.mrb[0].mxu0
      %v533 = vpop.f32.mrb[0].mxu0
      %v534 = vadd.f32 0.0, %v533
      %v535 = vpop.f32.mrb[0].mxu0
      %536 = vmatprep.mubr.bf16.mxu0 0
      %537 = vmatmul.mubr.bf16.gmra.mrb[0].mxu0 %v375
      %v538 = vpop.f32.mrb[0].mxu0
      %v539 = vadd.f32 0.0, %v538
      %v540 = vpop.f32.mrb[0].mxu0
      %v541 = vpop.f32.mrb[0].mxu0
      %v542 = vadd.f32 0.0, %v541
      %v543 = vpop.f32.mrb[0].mxu0
      %544 = vmatprep.mubr.bf16.mxu0 0
      %545 = vmatmul.mubr.bf16.gmra.mrb[0].mxu0 %v376
      %v546 = vpop.f32.mrb[0].mxu0
      %v547 = vadd.f32 0.0, %v546
      %v548 = vpop.f32.mrb[0].mxu0
      %v549 = vpop.f32.mrb[0].mxu0
      %v550 = vadd.f32 0.0, %v549
      %v551 = vpop.f32.mrb[0].mxu0
      %552 = vmatprep.mubr.bf16.mxu0 0
      %553 = vmatmul.mubr.bf16.gmra.mrb[0].mxu0 %v377
      %v554 = vpop.f32.mrb[0].mxu0
      %v555 = vadd.f32 0.0, %v554
      %v556 = vpop.f32.mrb[0].mxu0
      %v557 = vpop.f32.mrb[0].mxu0
      %v558 = vadd.f32 0.0, %v557
      %v559 = vpop.f32.mrb[0].mxu0
      %560 = vmatprep.mubr.bf16.mxu0 0
      %561 = vmatmul.mubr.bf16.gmra.mrb[0].mxu0 %v378
      %v562 = vpop.f32.mrb[0].mxu0
      %v563 = vadd.f32 0.0, %v562
      %v564 = vpop.f32.mrb[0].mxu0
      %v565 = vpop.f32.mrb[0].mxu0
      %v566 = vadd.f32 0.0, %v565
      %v567 = vpop.f32.mrb[0].mxu0
      %568 = vmatprep.mubr.bf16.mxu0 0
      %569 = vmatmul.mubr.bf16.gmra.mrb[0].mxu0 %v379
      %v570 = vpop.f32.mrb[0].mxu0
      %v571 = vadd.f32 0.0, %v570
      %v572 = vpop.f32.mrb[0].mxu0
      %v573 = vpop.f32.mrb[0].mxu0
      %v574 = vadd.f32 0.0, %v573
      %v575 = vpop.f32.mrb[0].mxu0
      %576 = vmatprep.mubr.bf16.mxu0 0
      %577 = vmatmul.mubr.bf16.gmra.mrb[0].mxu0 %v380
      %v578 = vpop.f32.mrb[0].mxu0
      %v579 = vadd.f32 0.0, %v578
      %v580 = vpop.f32.mrb[0].mxu0
      %v581 = vpop.f32.mrb[0].mxu0
      %v582 = vadd.f32 0.0, %v581
      %v583 = vpop.f32.mrb[0].mxu0
      %584 = vmatprep.mubr.bf16.mxu0 0
      %585 = vmatmul.mubr.bf16.gmra.mrb[0].mxu0 %v381
      %v586 = vpop.f32.mrb[0].mxu0
      %v587 = vadd.f32 0.0, %v586
      %v588 = vpop.f32.mrb[0].mxu0
      %v589 = vpop.f32.mrb[0].mxu0
      %v590 = vadd.f32 0.0, %v589
      %v591 = vpop.f32.mrb[0].mxu0
      %592 = vmatprep.mubr.bf16.mxu0 0
      %593 = vmatmul.mubr.bf16.gmra.mrb[0].mxu0 %v382
      %v594 = vpop.f32.mrb[0].mxu0
      %v595 = vadd.f32 0.0, %v594
      %v596 = vpop.f32.mrb[0].mxu0
      %v597 = vpop.f32.mrb[0].mxu0
      %v598 = vadd.f32 0.0, %v597
      %v599 = vpop.f32.mrb[0].mxu0
      %600 = vmatprep.mubr.bf16.mxu0 0
      %601 = vmatmul.mubr.bf16.gmra.mrb[0].mxu0 %v383
      %v602 = vpop.f32.mrb[0].mxu0
      %v603 = vadd.f32 0.0, %v602
      %v604 = vpop.f32.mrb[0].mxu0
      %v605 = vpop.f32.mrb[0].mxu0
      %v606 = vadd.f32 0.0, %v605
      %v607 = vpop.f32.mrb[0].mxu0
      %608 = vdwg.mxu0
      %v610 = vlaneseq
      %v611 = vshrl.u32 %v610, 7
      %v612 = vsub.s32 0, %v611
      %v613 = vrot.slane %v269, %v612
      %v615 = vmul.f32 %v483, %v613
      %v616 = vmul.f32 %v486, %v613
      %v617 = vmul.f32 %v491, %v613
      %v618 = vmul.f32 %v494, %v613
      %v619 = vmul.f32 %v499, %v613
      %v620 = vmul.f32 %v502, %v613
      %v621 = vmul.f32 %v507, %v613
      %v622 = vmul.f32 %v510, %v613
      %v623 = vmul.f32 %v515, %v613
      %v624 = vmul.f32 %v518, %v613
      %v625 = vmul.f32 %v523, %v613
      %v626 = vmul.f32 %v526, %v613
      %v627 = vmul.f32 %v531, %v613
      %v628 = vmul.f32 %v534, %v613
      %v629 = vmul.f32 %v539, %v613
      %v630 = vmul.f32 %v542, %v613
      %v631 = vmul.f32 %v547, %v613
      %v632 = vmul.f32 %v550, %v613
      %v633 = vmul.f32 %v555, %v613
      %v634 = vmul.f32 %v558, %v613
      %v635 = vmul.f32 %v563, %v613
      %v636 = vmul.f32 %v566, %v613
      %v637 = vmul.f32 %v571, %v613
      %v638 = vmul.f32 %v574, %v613
      %v639 = vmul.f32 %v579, %v613
      %v640 = vmul.f32 %v582, %v613
      %v641 = vmul.f32 %v587, %v613
      %v642 = vmul.f32 %v590, %v613
      %v643 = vmul.f32 %v595, %v613
      %v644 = vmul.f32 %v598, %v613
      %v645 = vmul.f32 %v603, %v613
      %v646 = vmul.f32 %v606, %v613
      %v648 = vlaneseq
      %v649 = vshrl.u32 %v648, 7
      %v650 = vsub.s32 0, %v649
      %v651 = vrot.slane %v271, %v650
      %v653 = vadd.f32 %v615, %v651
      %v654 = vadd.f32 %v616, %v651
      %v655 = vadd.f32 %v617, %v651
      %v656 = vadd.f32 %v618, %v651
      %v657 = vadd.f32 %v619, %v651
      %v658 = vadd.f32 %v620, %v651
      %v659 = vadd.f32 %v621, %v651
      %v660 = vadd.f32 %v622, %v651
      %v661 = vadd.f32 %v623, %v651
      %v662 = vadd.f32 %v624, %v651
      %v663 = vadd.f32 %v625, %v651
      %v664 = vadd.f32 %v626, %v651
      %v665 = vadd.f32 %v627, %v651
      %v666 = vadd.f32 %v628, %v651
      %v667 = vadd.f32 %v629, %v651
      %v668 = vadd.f32 %v630, %v651
      %v669 = vadd.f32 %v631, %v651
      %v670 = vadd.f32 %v632, %v651
      %v671 = vadd.f32 %v633, %v651
      %v672 = vadd.f32 %v634, %v651
      %v673 = vadd.f32 %v635, %v651
      %v674 = vadd.f32 %v636, %v651
      %v675 = vadd.f32 %v637, %v651
      %v676 = vadd.f32 %v638, %v651
      %v677 = vadd.f32 %v639, %v651
      %v678 = vadd.f32 %v640, %v651
      %v679 = vadd.f32 %v641, %v651
      %v680 = vadd.f32 %v642, %v651
      %v681 = vadd.f32 %v643, %v651
      %v682 = vadd.f32 %v644, %v651
      %v683 = vadd.f32 %v645, %v651
      %v684 = vadd.f32 %v646, %v651
      %s685 = scalar_lea.vmem %s4, %s21
      %v686 = vld [vmem:[%s685] sm:$0x1]
      %v687 = vsub.f32 0.0, %v653
      %v688 = vsub.f32 0.0, %v654
      %v689 = vsub.f32 0.0, %v655
      %v690 = vsub.f32 0.0, %v656
      %v691 = vsub.f32 0.0, %v657
      %v692 = vsub.f32 0.0, %v658
      %v693 = vsub.f32 0.0, %v659
      %v694 = vsub.f32 0.0, %v660
      %v695 = vsub.f32 0.0, %v661
      %v696 = vsub.f32 0.0, %v662
      %v697 = vsub.f32 0.0, %v663
      %v698 = vsub.f32 0.0, %v664
      %v699 = vsub.f32 0.0, %v665
      %v700 = vsub.f32 0.0, %v666
      %v701 = vsub.f32 0.0, %v667
      %v702 = vsub.f32 0.0, %v668
      %v703 = vsub.f32 0.0, %v669
      %v704 = vsub.f32 0.0, %v670
      %v705 = vsub.f32 0.0, %v671
      %v706 = vsub.f32 0.0, %v672
      %v707 = vsub.f32 0.0, %v673
      %v708 = vsub.f32 0.0, %v674
      %v709 = vsub.f32 0.0, %v675
      %v710 = vsub.f32 0.0, %v676
      %v711 = vsub.f32 0.0, %v677
      %v712 = vsub.f32 0.0, %v678
      %v713 = vsub.f32 0.0, %v679
      %v714 = vsub.f32 0.0, %v680
      %v715 = vsub.f32 0.0, %v681
      %v716 = vsub.f32 0.0, %v682
      %v717 = vsub.f32 0.0, %v683
      %v718 = vsub.f32 0.0, %v684
      %v719 = vmul.f32 %v687, 1.442695
      %v720 = vpow.pop %v719
      %v721 = vmul.f32 %v688, 1.442695
      %v722 = vpow.pop %v721
      %v723 = vmul.f32 %v689, 1.442695
      %v724 = vpow.pop %v723
      %v725 = vmul.f32 %v690, 1.442695
      %v726 = vpow.pop %v725
      %v727 = vmul.f32 %v691, 1.442695
      %v728 = vpow.pop %v727
      %v729 = vmul.f32 %v692, 1.442695
      %v730 = vpow.pop %v729
      %v731 = vmul.f32 %v693, 1.442695
      %v732 = vpow.pop %v731
      %v733 = vmul.f32 %v694, 1.442695
      %v734 = vpow.pop %v733
      %v735 = vmul.f32 %v695, 1.442695
      %v736 = vpow.pop %v735
      %v737 = vmul.f32 %v696, 1.442695
      %v738 = vpow.pop %v737
      %v739 = vmul.f32 %v697, 1.442695
      %v740 = vpow.pop %v739
      %v741 = vmul.f32 %v698, 1.442695
      %v742 = vpow.pop %v741
      %v743 = vmul.f32 %v699, 1.442695
      %v744 = vpow.pop %v743
      %v745 = vmul.f32 %v700, 1.442695
      %v746 = vpow.pop %v745
      %v747 = vmul.f32 %v701, 1.442695
      %v748 = vpow.pop %v747
      %v749 = vmul.f32 %v702, 1.442695
      %v750 = vpow.pop %v749
      %v751 = vmul.f32 %v703, 1.442695
      %v752 = vpow.pop %v751
      %v753 = vmul.f32 %v704, 1.442695
      %v754 = vpow.pop %v753
      %v755 = vmul.f32 %v705, 1.442695
      %v756 = vpow.pop %v755
      %v757 = vmul.f32 %v706, 1.442695
      %v758 = vpow.pop %v757
      %v759 = vmul.f32 %v707, 1.442695
      %v760 = vpow.pop %v759
      %v761 = vmul.f32 %v708, 1.442695
      %v762 = vpow.pop %v761
      %v763 = vmul.f32 %v709, 1.442695
      %v764 = vpow.pop %v763
      %v765 = vmul.f32 %v710, 1.442695
      %v766 = vpow.pop %v765
      %v767 = vmul.f32 %v711, 1.442695
      %v768 = vpow.pop %v767
      %v769 = vmul.f32 %v712, 1.442695
      %v770 = vpow.pop %v769
      %v771 = vmul.f32 %v713, 1.442695
      %v772 = vpow.pop %v771
      %v773 = vmul.f32 %v714, 1.442695
      %v774 = vpow.pop %v773
      %v775 = vmul.f32 %v715, 1.442695
      %v776 = vpow.pop %v775
      %v777 = vmul.f32 %v716, 1.442695
      %v778 = vpow.pop %v777
      %v779 = vmul.f32 %v717, 1.442695
      %v780 = vpow.pop %v779
      %v781 = vmul.f32 %v718, 1.442695
      %v782 = vpow.pop %v781
      %v783 = vadd.f32 %v720, 1.0
      %v784 = vadd.f32 %v722, 1.0
      %v785 = vadd.f32 %v724, 1.0
      %v786 = vadd.f32 %v726, 1.0
      %v787 = vadd.f32 %v728, 1.0
      %v788 = vadd.f32 %v730, 1.0
      %v789 = vadd.f32 %v732, 1.0
      %v790 = vadd.f32 %v734, 1.0
      %v791 = vadd.f32 %v736, 1.0
      %v792 = vadd.f32 %v738, 1.0
      %v793 = vadd.f32 %v740, 1.0
      %v794 = vadd.f32 %v742, 1.0
      %v795 = vadd.f32 %v744, 1.0
      %v796 = vadd.f32 %v746, 1.0
      %v797 = vadd.f32 %v748, 1.0
      %v798 = vadd.f32 %v750, 1.0
      %v799 = vadd.f32 %v752, 1.0
      %v800 = vadd.f32 %v754, 1.0
      %v801 = vadd.f32 %v756, 1.0
      %v802 = vadd.f32 %v758, 1.0
      %v803 = vadd.f32 %v760, 1.0
      %v804 = vadd.f32 %v762, 1.0
      %v805 = vadd.f32 %v764, 1.0
      %v806 = vadd.f32 %v766, 1.0
      %v807 = vadd.f32 %v768, 1.0
      %v808 = vadd.f32 %v770, 1.0
      %v809 = vadd.f32 %v772, 1.0
      %v810 = vadd.f32 %v774, 1.0
      %v811 = vadd.f32 %v776, 1.0
      %v812 = vadd.f32 %v778, 1.0
      %v813 = vadd.f32 %v780, 1.0
      %v814 = vadd.f32 %v782, 1.0
      %v815 = vrcp.pop %v783
      %v816 = vrcp.pop %v784
      %v817 = vrcp.pop %v785
      %v818 = vrcp.pop %v786
      %v819 = vrcp.pop %v787
      %v820 = vrcp.pop %v788
      %v821 = vrcp.pop %v789
      %v822 = vrcp.pop %v790
      %v823 = vrcp.pop %v791
      %v824 = vrcp.pop %v792
      %v825 = vrcp.pop %v793
      %v826 = vrcp.pop %v794
      %v827 = vrcp.pop %v795
      %v828 = vrcp.pop %v796
      %v829 = vrcp.pop %v797
      %v830 = vrcp.pop %v798
      %v831 = vrcp.pop %v799
      %v832 = vrcp.pop %v800
      %v833 = vrcp.pop %v801
      %v834 = vrcp.pop %v802
      %v835 = vrcp.pop %v803
      %v836 = vrcp.pop %v804
      %v837 = vrcp.pop %v805
      %v838 = vrcp.pop %v806
      %v839 = vrcp.pop %v807
      %v840 = vrcp.pop %v808
      %v841 = vrcp.pop %v809
      %v842 = vrcp.pop %v810
      %v843 = vrcp.pop %v811
      %v844 = vrcp.pop %v812
      %v845 = vrcp.pop %v813
      %v846 = vrcp.pop %v814
      %vm847 = vcmp.gt.f32.partialorder %v686, 0.5
      %v848 = vsel %vm847, 1, 0
      %v849 = vlaneseq
      %v850 = vshrl.u32 %v849, 7
      %v851 = vsub.s32 0, %v850
      %v852 = vrot.slane %v848, %v851
      %vm853 = vcmp.eq.s32.totalorder %v852, 1
      %v854 = vsel %vm853, %v815, %v653
      %v855 = vsel %vm853, %v816, %v654
      %v856 = vsel %vm853, %v817, %v655
      %v857 = vsel %vm853, %v818, %v656
      %v858 = vsel %vm853, %v819, %v657
      %v859 = vsel %vm853, %v820, %v658
      %v860 = vsel %vm853, %v821, %v659
      %v861 = vsel %vm853, %v822, %v660
      %v862 = vsel %vm853, %v823, %v661
      %v863 = vsel %vm853, %v824, %v662
      %v864 = vsel %vm853, %v825, %v663
      %v865 = vsel %vm853, %v826, %v664
      %v866 = vsel %vm853, %v827, %v665
      %v867 = vsel %vm853, %v828, %v666
      %v868 = vsel %vm853, %v829, %v667
      %v869 = vsel %vm853, %v830, %v668
      %v870 = vsel %vm853, %v831, %v669
      %v871 = vsel %vm853, %v832, %v670
      %v872 = vsel %vm853, %v833, %v671
      %v873 = vsel %vm853, %v834, %v672
      %v874 = vsel %vm853, %v835, %v673
      %v875 = vsel %vm853, %v836, %v674
      %v876 = vsel %vm853, %v837, %v675
      %v877 = vsel %vm853, %v838, %v676
      %v878 = vsel %vm853, %v839, %v677
      %v879 = vsel %vm853, %v840, %v678
      %v880 = vsel %vm853, %v841, %v679
      %v881 = vsel %vm853, %v842, %v680
      %v882 = vsel %vm853, %v843, %v681
      %v883 = vsel %vm853, %v844, %v682
      %v884 = vsel %vm853, %v845, %v683
      %v885 = vsel %vm853, %v846, %v684
      %886 = vst [vmem:[%s246] sm:$0xff] %v854
      %887 = vst [vmem:[%s246 + $0x8] sm:$0xff] %v855
      %888 = vst [vmem:[%s246 + $0x10] sm:$0xff] %v856
      %889 = vst [vmem:[%s246 + $0x18] sm:$0xff] %v857
      %890 = vst [vmem:[%s246 + $0x20] sm:$0xff] %v858
      %891 = vst [vmem:[%s246 + $0x28] sm:$0xff] %v859
      %892 = vst [vmem:[%s246 + $0x30] sm:$0xff] %v860
      %893 = vst [vmem:[%s246 + $0x38] sm:$0xff] %v861
      %894 = vst [vmem:[%s246 + $0x40] sm:$0xff] %v862
      %895 = vst [vmem:[%s246 + $0x48] sm:$0xff] %v863
      %896 = vst [vmem:[%s246 + $0x50] sm:$0xff] %v864
      %897 = vst [vmem:[%s246 + $0x58] sm:$0xff] %v865
      %898 = vst [vmem:[%s246 + $0x60] sm:$0xff] %v866
      %899 = vst [vmem:[%s246 + $0x68] sm:$0xff] %v867
      %900 = vst [vmem:[%s246 + $0x70] sm:$0xff] %v868
      %901 = vst [vmem:[%s246 + $0x78] sm:$0xff] %v869
      %902 = vst [vmem:[%s246 + $0x80] sm:$0xff] %v870
      %903 = vst [vmem:[%s246 + $0x88] sm:$0xff] %v871
      %904 = vst [vmem:[%s246 + $0x90] sm:$0xff] %v872
      %905 = vst [vmem:[%s246 + $0x98] sm:$0xff] %v873
      %906 = vst [vmem:[%s246 + $0xa0] sm:$0xff] %v874
      %907 = vst [vmem:[%s246 + $0xa8] sm:$0xff] %v875
      %908 = vst [vmem:[%s246 + $0xb0] sm:$0xff] %v876
      %909 = vst [vmem:[%s246 + $0xb8] sm:$0xff] %v877
      %910 = vst [vmem:[%s246 + $0xc0] sm:$0xff] %v878
      %911 = vst [vmem:[%s246 + $0xc8] sm:$0xff] %v879
      %912 = vst [vmem:[%s246 + $0xd0] sm:$0xff] %v880
      %913 = vst [vmem:[%s246 + $0xd8] sm:$0xff] %v881
      %914 = vst [vmem:[%s246 + $0xe0] sm:$0xff] %v882
      %915 = vst [vmem:[%s246 + $0xe8] sm:$0xff] %v883
      %916 = vst [vmem:[%s246 + $0xf0] sm:$0xff] %v884
      %917 = vst [vmem:[%s246 + $0xf8] sm:$0xff] %v885
      %s918 = smul.u32 32, %s20
      %p919 = scmp.lt.s32.totalorder %s918, 63
      %s920 = scalar_select %p919, %s918, 63
      %p921 = scmp.lt.s32.totalorder %s21, 0
      %s922 = scalar_select %p921, %s21, 0
      %s923 = sadd.s32 %s922, %s920
      %s924 = smul.addr %s923, 8
      %s925 = scalar_lea.vmem %s5, %s924
      // Predicated region
      $region41: #{deform_conv_forward.2} parent=39 // pred_check
        %p926 = pneg %p158
      $region42: #{deform_conv_forward.2} parent=39 // pred_check_branch
        %928 = sbr.rel (%p926) target = $region44
      $region43: #{deform_conv_forward.2} parent=39 // pred_region
        %s929 = smul.u32 32, %s20
      $region44: #{deform_conv_forward.2} parent=39 // pred_fallthru
        _
    $region40: #{deform_conv_forward.2} parent=5 // pred_fallthru
      _
    %p930 = scmp.le.s32.totalorder 2, %s11
    // Predicated region
    $region45: #{deform_conv_forward.2} parent=5 // pred_check
      %p931 = pneg %p930
    $region46: #{deform_conv_forward.2} parent=5 // pred_check_branch
      %933 = sbr.rel (%p931) target = $region48
    $region47: #{deform_conv_forward.2} parent=5 // pred_region
      %s934 = ssub.s32 %s11, 2
      // Predicated region
      $region49: #{deform_conv_forward.2} parent=47 // pred_check
        %p935 = pneg %p164
      $region50: #{deform_conv_forward.2} parent=47 // pred_check_branch
        %937 = sbr.rel (%p935) target = $region52
      $region51: #{deform_conv_forward.2} parent=47 // pred_region
        %s938 = smul.u32 32, %s22
        %p939 = scmp.lt.s32.totalorder %s938, 63
        %s940 = scalar_select %p939, %s938, 63
        %p941 = scmp.lt.s32.totalorder %s23, 0
        %s942 = scalar_select %p941, %s23, 0
        %s943 = sadd.s32 %s942, %s940
        %s944 = smul.addr %s943, 8
        %s945 = scalar_lea.vmem %s5, %s944
      $region52: #{deform_conv_forward.2} parent=47 // pred_fallthru
        _
    $region48: #{deform_conv_forward.2} parent=5 // pred_fallthru
      _
  $region6: #{deform_conv_forward.2} parent=0 // loop_footer
    %s15 = sadd.s32 1, %s11
  $region7: #{deform_conv_forward.2} parent=0 // loop_footer_branch
    %10 = sbr.rel target = $region3
  $region8: #{deform_conv_forward.2} parent=0 // loop_exit
    _

// kernel: mul.0
$region0: #{mul.0}
  #allocation0 [shape = 's32[1]{0}', space=sflag, size = 0x4, scoped, tag = 'scoped memory for mul.0']
  %s0 = inlined_call_operand.vmem [shape: bf16[512,36], index: 0, kind: input, shape index: {}]
  %s1 = inlined_call_operand.vmem [shape: bf16[512,36], index: 1, kind: input, shape index: {}]
  %s2 = inlined_call_operand.vmem [shape: bf16[512,36], index: 2, kind: output, shape index: {}]
  %v3 = vld [vmem:[%s0] sm:$0xf]
  %v4 = vunpack.c.l.bf16 %v3
  %v5 = vunpack.c.h.bf16 %v3
  %v6 = vld [vmem:[%s1] sm:$0xf]
  %v7 = vunpack.c.l.bf16 %v6
  %v8 = vunpack.c.h.bf16 %v6
  %9 = xla_tuple %v4, %v7
  %10 = xla_tuple %9
  %v11 = vmul.f32 %v4, %v7
  %12 = xla_tuple %v11
  %s13 = scalar_lea.vmem %s0, 16
  %v14 = vld [vmem:[%s13] sm:$0xf]
  %v15 = vunpack.c.l.bf16 %v14
  %v16 = vunpack.c.h.bf16 %v14
  %s17 = scalar_lea.vmem %s1, 16
  %v18 = vld [vmem:[%s17] sm:$0xf]
  %v19 = vunpack.c.l.bf16 %v18
  %v20 = vunpack.c.h.bf16 %v18
  %21 = xla_tuple %v15, %v19
  %22 = xla_tuple %21
  %v23 = vmul.f32 %v15, %v19
  %24 = xla_tuple %v23
  %s25 = scalar_lea.vmem %s2, 16
  %s26 = scalar_lea.vmem %s0, 32
  %v27 = vld [vmem:[%s26] sm:$0xf]
  %v28 = vunpack.c.l.bf16 %v27
  %v29 = vunpack.c.h.bf16 %v27
  %s30 = scalar_lea.vmem %s1, 32
  %v31 = vld [vmem:[%s30] sm:$0xf]
  %v32 = vunpack.c.l.bf16 %v31
  %v33 = vunpack.c.h.bf16 %v31
  %34 = xla_tuple %v28, %v32
  %35 = xla_tuple %34
  %v36 = vmul.f32 %v28, %v32
  %37 = xla_tuple %v36
  %s38 = scalar_lea.vmem %s2, 32
  %s39 = scalar_lea.vmem %s0, 48
  %v40 = vld [vmem:[%s39] sm:$0xf]
  %v41 = vunpack.c.l.bf16 %v40
  %v42 = vunpack.c.h.bf16 %v40
  %s43 = scalar_lea.vmem %s1, 48
  %v44 = vld [vmem:[%s43] sm:$0xf]
  %v45 = vunpack.c.l.bf16 %v44
  %v46 = vunpack.c.h.bf16 %v44
  %47 = xla_tuple %v41, %v45
  %48 = xla_tuple %47
  %v49 = vmul.f32 %v41, %v45
  %50 = xla_tuple %v49
  %s51 = scalar_lea.vmem %s2, 48
  %s52 = scalar_lea.vmem %s0, 64
  %v53 = vld [vmem:[%s52] sm:$0xf]
  %v54 = vunpack.c.l.bf16 %v53
  %v55 = vunpack.c.h.bf16 %v53
  %s56 = scalar_lea.vmem %s1, 64
  %v57 = vld [vmem:[%s56] sm:$0xf]
  %v58 = vunpack.c.l.bf16 %v57
  %v59 = vunpack.c.h.bf16 %v57
  %60 = xla_tuple %v54, %v58
  %61 = xla_tuple %60
  %v62 = vmul.f32 %v54, %v58
  %63 = xla_tuple %v62
  %s64 = scalar_lea.vmem %s2, 64
  %s65 = scalar_lea.vmem %s0, 4
  %v66 = vld [vmem:[%s65] sm:$0xf]
  %v67 = vunpack.c.l.bf16 %v66
  %v68 = vunpack.c.h.bf16 %v66
  %s69 = scalar_lea.vmem %s1, 4
  %v70 = vld [vmem:[%s69] sm:$0xf]
  %v71 = vunpack.c.l.bf16 %v70
  %v72 = vunpack.c.h.bf16 %v70
  %73 = xla_tuple %v67, %v71
  %74 = xla_tuple %73
  %v75 = vmul.f32 %v67, %v71
  %76 = xla_tuple %v75
  %s77 = scalar_lea.vmem %s2, 4
  %s79 = ssub.s32 0, 4
  %s80 = scalar_lea.vmem %s77, %s79
  %v81 = vpack.c.bf16 %v75, %v11
  %82 = vst [vmem:[%s80] sm:$0xff] %v81
  %s83 = scalar_lea.vmem %s0, 20
  %v84 = vld [vmem:[%s83] sm:$0xf]
  %v85 = vunpack.c.l.bf16 %v84
  %v86 = vunpack.c.h.bf16 %v84
  %s87 = scalar_lea.vmem %s1, 20
  %v88 = vld [vmem:[%s87] sm:$0xf]
  %v89 = vunpack.c.l.bf16 %v88
  %v90 = vunpack.c.h.bf16 %v88
  %91 = xla_tuple %v85, %v89
  %92 = xla_tuple %91
  %v93 = vmul.f32 %v85, %v89
  %94 = xla_tuple %v93
  %s95 = scalar_lea.vmem %s2, 20
  %s97 = ssub.s32 0, 4
  %s98 = scalar_lea.vmem %s95, %s97
  %v99 = vpack.c.bf16 %v93, %v23
  %100 = vst [vmem:[%s98] sm:$0xff] %v99
  %s101 = scalar_lea.vmem %s0, 36
  %v102 = vld [vmem:[%s101] sm:$0xf]
  %v103 = vunpack.c.l.bf16 %v102
  %v104 = vunpack.c.h.bf16 %v102
  %s105 = scalar_lea.vmem %s1, 36
  %v106 = vld [vmem:[%s105] sm:$0xf]
  %v107 = vunpack.c.l.bf16 %v106
  %v108 = vunpack.c.h.bf16 %v106
  %109 = xla_tuple %v103, %v107
  %110 = xla_tuple %109
  %v111 = vmul.f32 %v103, %v107
  %112 = xla_tuple %v111
  %s113 = scalar_lea.vmem %s2, 36
  %s115 = ssub.s32 0, 4
  %s116 = scalar_lea.vmem %s113, %s115
  %v117 = vpack.c.bf16 %v111, %v36
  %118 = vst [vmem:[%s116] sm:$0xff] %v117
  %s119 = scalar_lea.vmem %s0, 52
  %v120 = vld [vmem:[%s119] sm:$0xf]
  %v121 = vunpack.c.l.bf16 %v120
  %v122 = vunpack.c.h.bf16 %v120
  %s123 = scalar_lea.vmem %s1, 52
  %v124 = vld [vmem:[%s123] sm:$0xf]
  %v125 = vunpack.c.l.bf16 %v124
  %v126 = vunpack.c.h.bf16 %v124
  %127 = xla_tuple %v121, %v125
  %128 = xla_tuple %127
  %v129 = vmul.f32 %v121, %v125
  %130 = xla_tuple %v129
  %s131 = scalar_lea.vmem %s2, 52
  %s133 = ssub.s32 0, 4
  %s134 = scalar_lea.vmem %s131, %s133
  %v135 = vpack.c.bf16 %v129, %v49
  %136 = vst [vmem:[%s134] sm:$0xff] %v135
  %s137 = scalar_lea.vmem %s0, 68
  %v138 = vld [vmem:[%s137] sm:$0xf]
  %v139 = vunpack.c.l.bf16 %v138
  %v140 = vunpack.c.h.bf16 %v138
  %s141 = scalar_lea.vmem %s1, 68
  %v142 = vld [vmem:[%s141] sm:$0xf]
  %v143 = vunpack.c.l.bf16 %v142
  %v144 = vunpack.c.h.bf16 %v142
  %145 = xla_tuple %v139, %v143
  %146 = xla_tuple %145
  %v147 = vmul.f32 %v139, %v143
  %148 = xla_tuple %v147
  %s149 = scalar_lea.vmem %s2, 68
  %s151 = ssub.s32 0, 4
  %s152 = scalar_lea.vmem %s149, %s151
  %v153 = vpack.c.bf16 %v147, %v62
  %154 = vst [vmem:[%s152] sm:$0xff] %v153
  %s155 = scalar_lea.vmem %s0, 8
  %v156 = vld [vmem:[%s155] sm:$0xf]
  %v157 = vunpack.c.l.bf16 %v156
  %v158 = vunpack.c.h.bf16 %v156
  %s159 = scalar_lea.vmem %s1, 8
  %v160 = vld [vmem:[%s159] sm:$0xf]
  %v161 = vunpack.c.l.bf16 %v160
  %v162 = vunpack.c.h.bf16 %v160
  %163 = xla_tuple %v157, %v161
  %164 = xla_tuple %163
  %v165 = vmul.f32 %v157, %v161
  %166 = xla_tuple %v165
  %s167 = scalar_lea.vmem %s2, 8
  %s168 = scalar_lea.vmem %s0, 24
  %v169 = vld [vmem:[%s168] sm:$0xf]
  %v170 = vunpack.c.l.bf16 %v169
  %v171 = vunpack.c.h.bf16 %v169
  %s172 = scalar_lea.vmem %s1, 24
  %v173 = vld [vmem:[%s172] sm:$0xf]
  %v174 = vunpack.c.l.bf16 %v173
  %v175 = vunpack.c.h.bf16 %v173
  %176 = xla_tuple %v170, %v174
  %177 = xla_tuple %176
  %v178 = vmul.f32 %v170, %v174
  %179 = xla_tuple %v178
  %s180 = scalar_lea.vmem %s2, 24
  %s181 = scalar_lea.vmem %s0, 40
  %v182 = vld [vmem:[%s181] sm:$0xf]
  %v183 = vunpack.c.l.bf16 %v182
  %v184 = vunpack.c.h.bf16 %v182
  %s185 = scalar_lea.vmem %s1, 40
  %v186 = vld [vmem:[%s185] sm:$0xf]
  %v187 = vunpack.c.l.bf16 %v186
  %v188 = vunpack.c.h.bf16 %v186
  %189 = xla_tuple %v183, %v187
  %190 = xla_tuple %189
  %v191 = vmul.f32 %v183, %v187
  %192 = xla_tuple %v191
  %s193 = scalar_lea.vmem %s2, 40
  %s194 = scalar_lea.vmem %s0, 56
  %v195 = vld [vmem:[%s194] sm:$0xf]
  %v196 = vunpack.c.l.bf16 %v195
  %v197 = vunpack.c.h.bf16 %v195
  %s198 = scalar_lea.vmem %s1, 56
  %v199 = vld [vmem:[%s198] sm:$0xf]
  %v200 = vunpack.c.l.bf16 %v199
  %v201 = vunpack.c.h.bf16 %v199
  %202 = xla_tuple %v196, %v200
  %203 = xla_tuple %202
  %v204 = vmul.f32 %v196, %v200
  %205 = xla_tuple %v204
  %s206 = scalar_lea.vmem %s2, 56
  %s207 = scalar_lea.vmem %s0, 72
  %v208 = vld [vmem:[%s207] sm:$0xf]
  %v209 = vunpack.c.l.bf16 %v208
  %v210 = vunpack.c.h.bf16 %v208
  %s211 = scalar_lea.vmem %s1, 72
  %v212 = vld [vmem:[%s211] sm:$0xf]
  %v213 = vunpack.c.l.bf16 %v212
  %v214 = vunpack.c.h.bf16 %v212
  %215 = xla_tuple %v209, %v213
  %216 = xla_tuple %215
  %v217 = vmul.f32 %v209, %v213
  %218 = xla_tuple %v217
  %s219 = scalar_lea.vmem %s2, 72
  %s220 = scalar_lea.vmem %s0, 12
  %v221 = vld [vmem:[%s220] sm:$0xf]
  %v222 = vunpack.c.l.bf16 %v221
  %v223 = vunpack.c.h.bf16 %v221
  %s224 = scalar_lea.vmem %s1, 12
  %v225 = vld [vmem:[%s224] sm:$0xf]
  %v226 = vunpack.c.l.bf16 %v225
  %v227 = vunpack.c.h.bf16 %v225
  %228 = xla_tuple %v222, %v226
  %229 = xla_tuple %228
  %v230 = vmul.f32 %v222, %v226
  %231 = xla_tuple %v230
  %s232 = scalar_lea.vmem %s2, 12
  %s234 = ssub.s32 0, 4
  %s235 = scalar_lea.vmem %s232, %s234
  %v236 = vpack.c.bf16 %v230, %v165
  %237 = vst [vmem:[%s235] sm:$0xff] %v236
  %s238 = scalar_lea.vmem %s0, 28
  %v239 = vld [vmem:[%s238] sm:$0xf]
  %v240 = vunpack.c.l.bf16 %v239
  %v241 = vunpack.c.h.bf16 %v239
  %s242 = scalar_lea.vmem %s1, 28
  %v243 = vld [vmem:[%s242] sm:$0xf]
  %v244 = vunpack.c.l.bf16 %v243
  %v245 = vunpack.c.h.bf16 %v243
  %246 = xla_tuple %v240, %v244
  %247 = xla_tuple %246
  %v248 = vmul.f32 %v240, %v244
  %249 = xla_tuple %v248
  %s250 = scalar_lea.vmem %s2, 28
  %s252 = ssub.s32 0, 4
  %s253 = scalar_lea.vmem %s250, %s252
  %v254 = vpack.c.bf16 %v248, %v178
  %255 = vst [vmem:[%s253] sm:$0xff] %v254
  %s256 = scalar_lea.vmem %s0, 44
  %v257 = vld [vmem:[%s256] sm:$0xf]
  %v258 = vunpack.c.l.bf16 %v257
  %v259 = vunpack.c.h.bf16 %v257
  %s260 = scalar_lea.vmem %s1, 44
  %v261 = vld [vmem:[%s260] sm:$0xf]
  %v262 = vunpack.c.l.bf16 %v261
  %v263 = vunpack.c.h.bf16 %v261
  %264 = xla_tuple %v258, %v262
  %265 = xla_tuple %264
  %v266 = vmul.f32 %v258, %v262
  %267 = xla_tuple %v266
  %s268 = scalar_lea.vmem %s2, 44
  %s270 = ssub.s32 0, 4
  %s271 = scalar_lea.vmem %s268, %s270
  %v272 = vpack.c.bf16 %v266, %v191
  %273 = vst [vmem:[%s271] sm:$0xff] %v272
  %s274 = scalar_lea.vmem %s0, 60
  %v275 = vld [vmem:[%s274] sm:$0xf]
  %v276 = vunpack.c.l.bf16 %v275
  %v277 = vunpack.c.h.bf16 %v275
  %s278 = scalar_lea.vmem %s1, 60
  %v279 = vld [vmem:[%s278] sm:$0xf]
  %v280 = vunpack.c.l.bf16 %v279
  %v281 = vunpack.c.h.bf16 %v279
  %282 = xla_tuple %v276, %v280
  %283 = xla_tuple %282
  %v284 = vmul.f32 %v276, %v280
  %285 = xla_tuple %v284
  %s286 = scalar_lea.vmem %s2, 60
  %s288 = ssub.s32 0, 4
  %s289 = scalar_lea.vmem %s286, %s288
  %v290 = vpack.c.bf16 %v284, %v204
  %291 = vst [vmem:[%s289] sm:$0xff] %v290
  %s292 = scalar_lea.vmem %s0, 76
  %v293 = vld [vmem:[%s292] sm:$0xf]
  %v294 = vunpack.c.l.bf16 %v293
  %v295 = vunpack.c.h.bf16 %v293
  %s296 = scalar_lea.vmem %s1, 76
  %v297 = vld [vmem:[%s296] sm:$0xf]
  %v298 = vunpack.c.l.bf16 %v297
  %v299 = vunpack.c.h.bf16 %v297
  %300 = xla_tuple %v294, %v298
  %301 = xla_tuple %300
  %v302 = vmul.f32 %v294, %v298
  %303 = xla_tuple %v302
  %s304 = scalar_lea.vmem %s2, 76
  %s306 = ssub.s32 0, 4
  %s307 = scalar_lea.vmem %s304, %s306
  %v308 = vpack.c.bf16 %v302, %v217
  %309 = vst [vmem:[%s307] sm:$0xff] %v308

// kernel: deform_conv_forward.3
$region0: #{deform_conv_forward.3}
  #allocation0 [shape = 'u32[]', space=smem, size = 0x4, offset = 0x4, fixed_abs, tag = 'smem constant byte address 0x4 - core index']
  #allocation1 [shape = 'u32[144,128]{1,0:T(1,128)}', space=vmem, size = 0x12000, scoped, tag = 'internal scratch']
  %s0 = inlined_call_operand.vmem [shape: bf16[512,128], index: 0, kind: input, shape index: {}]
  %s1 = inlined_call_operand.vmem [shape: bf16[1,128,128], index: 1, kind: input, shape index: {}]
  %s2 = inlined_call_operand.vmem [shape: f32[1,1,128], index: 2, kind: input, shape index: {}]
  %s3 = inlined_call_operand.vmem [shape: f32[1,1,128], index: 3, kind: input, shape index: {}]
  %s4 = inlined_call_operand.vmem [shape: f32[1,1,128], index: 4, kind: input, shape index: {}]
  %s5 = inlined_call_operand.vmem [shape: bf16[512,128], index: 5, kind: output, shape index: {}]
  %s6 = sld [smem:[#allocation0]]
  $region53: #{deform_conv_forward.3} parent=0
    _
  %s8 = ssub.s32 1, %s6
  %s9 = scalar_select 0, %s8, %s6
  loop: start=0, step=1, limit=4
  $region2: #{deform_conv_forward.3} parent=0 // loop_pre_header
    _
  $region3: #{deform_conv_forward.3} parent=0 // loop_header
    %s11 = sphi 0, %s15
    %p12 = scmp.ge.s32.totalorder %s11, 4
    %s18 = sphi 0, %s30
    %s19 = sphi 0, %s26
    %s20 = sphi 0, %s18
    %s21 = sphi 0, %s19
    %s22 = sphi 0, %s20
    %s23 = sphi 0, %s21
    %s33 = sphi 0, %s35
    %s36 = sphi 0, %s33
    %s37 = sphi 0, %s36
    %s53 = sphi 0, %s37
    %s57 = sphi 0, %s57
    %s59 = sphi 0, %s57
    %s60 = sphi 0, %s59
    %s74 = sphi 0, %s60
    %s78 = sphi 0, %s78
    %s80 = sphi 0, %s78
    %s81 = sphi 0, %s80
    %s95 = sphi 0, %s81
    %s99 = sphi 0, %s99
    %s101 = sphi 0, %s99
    %s102 = sphi 0, %s101
    %s116 = sphi 0, %s102
    %s120 = sphi 0, %s120
    %s122 = sphi 0, %s120
    %s123 = sphi 0, %s122
    %s137 = sphi 0, %s123
    %s145 = sphi 0, %s147
    %s148 = sphi 0, %s145
    %s149 = sphi 0, %s148
    %s165 = sphi 0, %s149
  $region4: #{deform_conv_forward.3} parent=0 // loop_header_branch
    %14 = sbr.rel (%p12) target = $region8
  $region5: #{deform_conv_forward.3} parent=0 // loop_body
    %s16 = ssub.s32 %s11, 1
    %s17 = ssub.s32 %s11, 2
    %s24 = sadd.s32 1, %s19
    %p25 = scmp.ge.s32.totalorder %s24, 1
    %s26 = scalar_select %p25, 0, %s24
    %s27 = sadd.s32 1, %s18
    %s28 = scalar_select %p25, %s27, %s18
    %p29 = scmp.ge.s32.totalorder %s28, 2
    %s30 = scalar_select %p29, 0, %s28
    %s31 = ssub.s32 %s18, %s30
    %p32 = scmp.eq.s32.totalorder %s31, 0
    %s34 = sadd.s32 %s33, 1
    %s35 = scalar_select %p32, %s33, %s34
    %p38 = pneg %p32
    %p39 = scmp.eq.s32.totalorder %s11, 1
    %p40 = por %p38, %p39
    %p41 = scmp.ne.s32.totalorder %s33, %s36
    %p42 = scmp.eq.s32.totalorder %s11, 0
    %p43 = por %p41, %p42
    %p44 = scmp.ne.s32.totalorder %s33, %s36
    %p45 = scmp.eq.s32.totalorder %s16, 1
    %p46 = por %p44, %p45
    %p47 = scmp.ne.s32.totalorder %s36, %s37
    %p48 = scmp.eq.s32.totalorder %s16, 0
    %p49 = por %p47, %p48
    %p50 = scmp.ne.s32.totalorder %s36, %s37
    %p51 = scmp.eq.s32.totalorder %s17, 1
    %p52 = por %p50, %p51
    %p54 = scmp.ne.s32.totalorder %s37, %s53
    %p55 = scmp.eq.s32.totalorder %s17, 0
    %p56 = por %p54, %p55
    %s58 = sadd.s32 %s57, 1
    %p61 = scmp.eq.s32.totalorder %s11, 1
    %p62 = scmp.ne.s32.totalorder %s57, %s59
    %p63 = scmp.eq.s32.totalorder %s11, 0
    %p64 = por %p62, %p63
    %p65 = scmp.ne.s32.totalorder %s57, %s59
    %p66 = scmp.eq.s32.totalorder %s16, 1
    %p67 = por %p65, %p66
    %p68 = scmp.ne.s32.totalorder %s59, %s60
    %p69 = scmp.eq.s32.totalorder %s16, 0
    %p70 = por %p68, %p69
    %p71 = scmp.ne.s32.totalorder %s59, %s60
    %p72 = scmp.eq.s32.totalorder %s17, 1
    %p73 = por %p71, %p72
    %p75 = scmp.ne.s32.totalorder %s60, %s74
    %p76 = scmp.eq.s32.totalorder %s17, 0
    %p77 = por %p75, %p76
    %s79 = sadd.s32 %s78, 1
    %p82 = scmp.eq.s32.totalorder %s11, 1
    %p83 = scmp.ne.s32.totalorder %s78, %s80
    %p84 = scmp.eq.s32.totalorder %s11, 0
    %p85 = por %p83, %p84
    %p86 = scmp.ne.s32.totalorder %s78, %s80
    %p87 = scmp.eq.s32.totalorder %s16, 1
    %p88 = por %p86, %p87
    %p89 = scmp.ne.s32.totalorder %s80, %s81
    %p90 = scmp.eq.s32.totalorder %s16, 0
    %p91 = por %p89, %p90
    %p92 = scmp.ne.s32.totalorder %s80, %s81
    %p93 = scmp.eq.s32.totalorder %s17, 1
    %p94 = por %p92, %p93
    %p96 = scmp.ne.s32.totalorder %s81, %s95
    %p97 = scmp.eq.s32.totalorder %s17, 0
    %p98 = por %p96, %p97
    %s100 = sadd.s32 %s99, 1
    %p103 = scmp.eq.s32.totalorder %s11, 1
    %p104 = scmp.ne.s32.totalorder %s99, %s101
    %p105 = scmp.eq.s32.totalorder %s11, 0
    %p106 = por %p104, %p105
    %p107 = scmp.ne.s32.totalorder %s99, %s101
    %p108 = scmp.eq.s32.totalorder %s16, 1
    %p109 = por %p107, %p108
    %p110 = scmp.ne.s32.totalorder %s101, %s102
    %p111 = scmp.eq.s32.totalorder %s16, 0
    %p112 = por %p110, %p111
    %p113 = scmp.ne.s32.totalorder %s101, %s102
    %p114 = scmp.eq.s32.totalorder %s17, 1
    %p115 = por %p113, %p114
    %p117 = scmp.ne.s32.totalorder %s102, %s116
    %p118 = scmp.eq.s32.totalorder %s17, 0
    %p119 = por %p117, %p118
    %s121 = sadd.s32 %s120, 1
    %p124 = scmp.eq.s32.totalorder %s11, 1
    %p125 = scmp.ne.s32.totalorder %s120, %s122
    %p126 = scmp.eq.s32.totalorder %s11, 0
    %p127 = por %p125, %p126
    %p128 = scmp.ne.s32.totalorder %s120, %s122
    %p129 = scmp.eq.s32.totalorder %s16, 1
    %p130 = por %p128, %p129
    %p131 = scmp.ne.s32.totalorder %s122, %s123
    %p132 = scmp.eq.s32.totalorder %s16, 0
    %p133 = por %p131, %p132
    %p134 = scmp.ne.s32.totalorder %s122, %s123
    %p135 = scmp.eq.s32.totalorder %s17, 1
    %p136 = por %p134, %p135
    %p138 = scmp.ne.s32.totalorder %s123, %s137
    %p139 = scmp.eq.s32.totalorder %s17, 0
    %p140 = por %p138, %p139
    %s141 = ssub.s32 %s18, %s30
    %s142 = ssub.s32 %s19, %s26
    %s143 = sor.u32 %s141, %s142
    %p144 = scmp.eq.s32.totalorder %s143, 0
    %s146 = sadd.s32 %s145, 1
    %s147 = scalar_select %p144, %s145, %s146
    %p150 = pneg %p144
    %p151 = scmp.eq.s32.totalorder %s11, 1
    %p152 = por %p150, %p151
    %p153 = scmp.ne.s32.totalorder %s145, %s148
    %p154 = scmp.eq.s32.totalorder %s11, 0
    %p155 = por %p153, %p154
    %p156 = scmp.ne.s32.totalorder %s145, %s148
    %p157 = scmp.eq.s32.totalorder %s16, 1
    %p158 = por %p156, %p157
    %p159 = scmp.ne.s32.totalorder %s148, %s149
    %p160 = scmp.eq.s32.totalorder %s16, 0
    %p161 = por %p159, %p160
    %p162 = scmp.ne.s32.totalorder %s148, %s149
    %p163 = scmp.eq.s32.totalorder %s17, 1
    %p164 = por %p162, %p163
    %p166 = scmp.ne.s32.totalorder %s149, %s165
    %p167 = scmp.eq.s32.totalorder %s17, 0
    %p168 = por %p166, %p167
    %p169 = scmp.le.s32.totalorder 1, %s11
    %p170 = scmp.lt.s32.totalorder %s11, 3
    %p171 = pnand %p169, %p170
    %p172 = pneg %p171
    // Predicated region
    $region9: #{deform_conv_forward.3} parent=5 // pred_check
      _
    $region10: #{deform_conv_forward.3} parent=5 // pred_check_branch
      %174 = sbr.rel (%p171) target = $region12
    $region11: #{deform_conv_forward.3} parent=5 // pred_region
      %s175 = ssub.s32 %s11, 1
      // Predicated region
      $region13: #{deform_conv_forward.3} parent=11 // pred_check
        %p176 = pneg %p70
      $region14: #{deform_conv_forward.3} parent=11 // pred_check_branch
        %178 = sbr.rel (%p176) target = $region16
      $region15: #{deform_conv_forward.3} parent=11 // pred_region
        _
      $region16: #{deform_conv_forward.3} parent=11 // pred_fallthru
        _
      // Predicated region
      $region17: #{deform_conv_forward.3} parent=11 // pred_check
        %p179 = pneg %p91
      $region18: #{deform_conv_forward.3} parent=11 // pred_check_branch
        %181 = sbr.rel (%p179) target = $region20
      $region19: #{deform_conv_forward.3} parent=11 // pred_region
        _
      $region20: #{deform_conv_forward.3} parent=11 // pred_fallthru
        _
      // Predicated region
      $region21: #{deform_conv_forward.3} parent=11 // pred_check
        %p182 = pneg %p112
      $region22: #{deform_conv_forward.3} parent=11 // pred_check_branch
        %184 = sbr.rel (%p182) target = $region24
      $region23: #{deform_conv_forward.3} parent=11 // pred_region
        _
      $region24: #{deform_conv_forward.3} parent=11 // pred_fallthru
        _
      // Predicated region
      $region25: #{deform_conv_forward.3} parent=11 // pred_check
        %p185 = pneg %p133
      $region26: #{deform_conv_forward.3} parent=11 // pred_check_branch
        %187 = sbr.rel (%p185) target = $region28
      $region27: #{deform_conv_forward.3} parent=11 // pred_region
        _
      $region28: #{deform_conv_forward.3} parent=11 // pred_fallthru
        _
    $region12: #{deform_conv_forward.3} parent=5 // pred_fallthru
      _
    %p188 = scmp.lt.s32.totalorder %s11, 2
    // Predicated region
    $region29: #{deform_conv_forward.3} parent=5 // pred_check
      %p189 = pneg %p188
    $region30: #{deform_conv_forward.3} parent=5 // pred_check_branch
      %191 = sbr.rel (%p189) target = $region32
    $region31: #{deform_conv_forward.3} parent=5 // pred_region
      // Predicated region
      $region33: #{deform_conv_forward.3} parent=31 // pred_check
        %p192 = pneg %p43
      $region34: #{deform_conv_forward.3} parent=31 // pred_check_branch
        %194 = sbr.rel (%p192) target = $region36
      $region35: #{deform_conv_forward.3} parent=31 // pred_region
        %s195 = smul.u32 32, %s18
        %p196 = scmp.lt.s32.totalorder %s195, 63
        %s197 = scalar_select %p196, %s195, 63
        %s198 = smul.addr %s197, 4
        %s199 = scalar_lea.vmem %s0, %s198
        %s200 = smul.u32 32, %s18
      $region36: #{deform_conv_forward.3} parent=31 // pred_fallthru
        _
    $region32: #{deform_conv_forward.3} parent=5 // pred_fallthru
      _
    %p201 = scmp.le.s32.totalorder 1, %s11
    %p202 = scmp.lt.s32.totalorder %s11, 3
    %p203 = pnand %p201, %p202
    %p204 = pneg %p203
    // Predicated region
    $region37: #{deform_conv_forward.3} parent=5 // pred_check
      _
    $region38: #{deform_conv_forward.3} parent=5 // pred_check_branch
      %206 = sbr.rel (%p203) target = $region40
    $region39: #{deform_conv_forward.3} parent=5 // pred_region
      %s207 = ssub.s32 %s11, 1
      %s208 = smul.u32 32, %s20
      %p209 = scmp.lt.s32.totalorder %s208, 63
      %s210 = scalar_select %p209, %s208, 63
      %s211 = smul.addr %s210, 4
      %s212 = scalar_lea.vmem %s0, %s211
      %p213 = pneg %p49
      %p214 = pneg %p46
      %p215 = pneg %p70
      %p216 = pneg %p67
      %p217 = pneg %p91
      %p218 = pneg %p88
      %p219 = pneg %p112
      %p220 = pneg %p109
      %p221 = pneg %p133
      %p222 = pneg %p130
      %p223 = pneg %p161
      %p224 = pneg %p158
      %s225 = smul.u32 32, %s20
      %p226 = scmp.lt.s32.totalorder %s225, 63
      %s227 = scalar_select %p226, %s225, 63
      %p228 = scmp.lt.s32.totalorder %s21, 0
      %s229 = scalar_select %p228, %s21, 0
      %s230 = sadd.s32 %s229, %s227
      %s231 = smul.addr %s230, 4
      %s232 = scalar_lea.vmem %s5, %s231
      %s233 = smul.u32 32, %s20
      %p234 = scmp.lt.s32.totalorder %s233, 63
      %s235 = scalar_select %p234, %s233, 63
      %s236 = smul.addr %s235, 4
      %s237 = scalar_lea.vmem %s0, %s236
      %s238 = smul.u32 32, %s20
      %s239 = smul.u32 32, %s20
      %p240 = scmp.lt.s32.totalorder %s239, 63
      %s241 = scalar_select %p240, %s239, 63
      %p242 = scmp.lt.s32.totalorder %s21, 0
      %s243 = scalar_select %p242, %s21, 0
      %s244 = sadd.s32 %s243, %s241
      %s245 = smul.addr %s244, 4
      %s246 = scalar_lea.vmem %s5, %s245
      %s247 = smul.u32 32, %s20
      %s249 = smul.u32 %s21, 16
      %s250 = smul.addr %s249, 4
      %s251 = scalar_lea.vmem %s1, %s250
      %v252 = vld [vmem:[%s251] sm:$0xf]
      %v253 = vld [vmem:[%s251 + $0x4] sm:$0xf]
      %v254 = vld [vmem:[%s251 + $0x8] sm:$0xf]
      %v255 = vld [vmem:[%s251 + $0xc] sm:$0xf]
      %v256 = vld [vmem:[%s251 + $0x10] sm:$0xf]
      %v257 = vld [vmem:[%s251 + $0x14] sm:$0xf]
      %v258 = vld [vmem:[%s251 + $0x18] sm:$0xf]
      %v259 = vld [vmem:[%s251 + $0x1c] sm:$0xf]
      %v260 = vld [vmem:[%s251 + $0x20] sm:$0xf]
      %v261 = vld [vmem:[%s251 + $0x24] sm:$0xf]
      %v262 = vld [vmem:[%s251 + $0x28] sm:$0xf]
      %v263 = vld [vmem:[%s251 + $0x2c] sm:$0xf]
      %v264 = vld [vmem:[%s251 + $0x30] sm:$0xf]
      %v265 = vld [vmem:[%s251 + $0x34] sm:$0xf]
      %v266 = vld [vmem:[%s251 + $0x38] sm:$0xf]
      %v267 = vld [vmem:[%s251 + $0x3c] sm:$0xf]
      %s268 = scalar_lea.vmem %s2, %s21
      %v269 = vld [vmem:[%s268] sm:$0x1]
      %s270 = scalar_lea.vmem %s3, %s21
      %v271 = vld [vmem:[%s270] sm:$0x1]
      %v272 = vld [vmem:[%s237] sm:$0xf]
      %v273 = vld [vmem:[%s237 + $0x4] sm:$0xf]
      %v274 = vld [vmem:[%s237 + $0x8] sm:$0xf]
      %v275 = vld [vmem:[%s237 + $0xc] sm:$0xf]
      %v276 = vld [vmem:[%s237 + $0x10] sm:$0xf]
      %v277 = vld [vmem:[%s237 + $0x14] sm:$0xf]
      %v278 = vld [vmem:[%s237 + $0x18] sm:$0xf]
      %v279 = vld [vmem:[%s237 + $0x1c] sm:$0xf]
      %v280 = vld [vmem:[%s237 + $0x20] sm:$0xf]
      %v281 = vld [vmem:[%s237 + $0x24] sm:$0xf]
      %v282 = vld [vmem:[%s237 + $0x28] sm:$0xf]
      %v283 = vld [vmem:[%s237 + $0x2c] sm:$0xf]
      %v284 = vld [vmem:[%s237 + $0x30] sm:$0xf]
      %v285 = vld [vmem:[%s237 + $0x34] sm:$0xf]
      %v286 = vld [vmem:[%s237 + $0x38] sm:$0xf]
      %v287 = vld [vmem:[%s237 + $0x3c] sm:$0xf]
      %v288 = vld [vmem:[%s237 + $0x40] sm:$0xf]
      %v289 = vld [vmem:[%s237 + $0x44] sm:$0xf]
      %v290 = vld [vmem:[%s237 + $0x48] sm:$0xf]
      %v291 = vld [vmem:[%s237 + $0x4c] sm:$0xf]
      %v292 = vld [vmem:[%s237 + $0x50] sm:$0xf]
      %v293 = vld [vmem:[%s237 + $0x54] sm:$0xf]
      %v294 = vld [vmem:[%s237 + $0x58] sm:$0xf]
      %v295 = vld [vmem:[%s237 + $0x5c] sm:$0xf]
      %v296 = vld [vmem:[%s237 + $0x60] sm:$0xf]
      %v297 = vld [vmem:[%s237 + $0x64] sm:$0xf]
      %v298 = vld [vmem:[%s237 + $0x68] sm:$0xf]
      %v299 = vld [vmem:[%s237 + $0x6c] sm:$0xf]
      %v300 = vld [vmem:[%s237 + $0x70] sm:$0xf]
      %v301 = vld [vmem:[%s237 + $0x74] sm:$0xf]
      %v302 = vld [vmem:[%s237 + $0x78] sm:$0xf]
      %v303 = vld [vmem:[%s237 + $0x7c] sm:$0xf]
      %v336 = vunpack.c.l.b16 %v272
      %v337 = vunpack.c.l.b16 %v273
      %v338 = vunpack.c.l.b16 %v274
      %v339 = vunpack.c.l.b16 %v275
      %v340 = vunpack.c.l.b16 %v276
      %v341 = vunpack.c.l.b16 %v277
      %v342 = vunpack.c.l.b16 %v278
      %v343 = vunpack.c.l.b16 %v279
      %v344 = vunpack.c.l.b16 %v280
      %v345 = vunpack.c.l.b16 %v281
      %v346 = vunpack.c.l.b16 %v282
      %v347 = vunpack.c.l.b16 %v283
      %v348 = vunpack.c.l.b16 %v284
      %v349 = vunpack.c.l.b16 %v285
      %v350 = vunpack.c.l.b16 %v286
      %v351 = vunpack.c.l.b16 %v287
      %v352 = vunpack.c.l.b16 %v288
      %v353 = vunpack.c.l.b16 %v289
      %v354 = vunpack.c.l.b16 %v290
      %v355 = vunpack.c.l.b16 %v291
      %v356 = vunpack.c.l.b16 %v292
      %v357 = vunpack.c.l.b16 %v293
      %v358 = vunpack.c.l.b16 %v294
      %v359 = vunpack.c.l.b16 %v295
      %v360 = vunpack.c.l.b16 %v296
      %v361 = vunpack.c.l.b16 %v297
      %v362 = vunpack.c.l.b16 %v298
      %v363 = vunpack.c.l.b16 %v299
      %v364 = vunpack.c.l.b16 %v300
      %v365 = vunpack.c.l.b16 %v301
      %v366 = vunpack.c.l.b16 %v302
      %v367 = vunpack.c.l.b16 %v303
      %v368 = vpack.c.b16 %v337, %v336
      %v369 = vpack.c.b16 %v339, %v338
      %v370 = vpack.c.b16 %v341, %v340
      %v371 = vpack.c.b16 %v343, %v342
      %v372 = vpack.c.b16 %v345, %v344
      %v373 = vpack.c.b16 %v347, %v346
      %v374 = vpack.c.b16 %v349, %v348
      %v375 = vpack.c.b16 %v351, %v350
      %v376 = vpack.c.b16 %v353, %v352
      %v377 = vpack.c.b16 %v355, %v354
      %v378 = vpack.c.b16 %v357, %v356
      %v379 = vpack.c.b16 %v359, %v358
      %v380 = vpack.c.b16 %v361, %v360
      %v381 = vpack.c.b16 %v363, %v362
      %v382 = vpack.c.b16 %v365, %v364
      %v383 = vpack.c.b16 %v367, %v366
      %v416 = vunpack.c.l.b16 %v252
      %v417 = vunpack.c.l.b16 %v253
      %v418 = vunpack.c.l.b16 %v254
      %v419 = vunpack.c.l.b16 %v255
      %v420 = vunpack.c.l.b16 %v256
      %v421 = vunpack.c.l.b16 %v257
      %v422 = vunpack.c.l.b16 %v258
      %v423 = vunpack.c.l.b16 %v259
      %v424 = vunpack.c.l.b16 %v260
      %v425 = vunpack.c.l.b16 %v261
      %v426 = vunpack.c.l.b16 %v262
      %v427 = vunpack.c.l.b16 %v263
      %v428 = vunpack.c.l.b16 %v264
      %v429 = vunpack.c.l.b16 %v265
      %v430 = vunpack.c.l.b16 %v266
      %v431 = vunpack.c.l.b16 %v267
      %v432 = vpack.c.b16 %v417, %v416
      %v433 = vpack.c.b16 %v419, %v418
      %v434 = vpack.c.b16 %v421, %v420
      %v435 = vpack.c.b16 %v423, %v422
      %v436 = vpack.c.b16 %v425, %v424
      %v437 = vpack.c.b16 %v427, %v426
      %v438 = vpack.c.b16 %v429, %v428
      %v439 = vpack.c.b16 %v431, %v430
      %448 = vmatprep.subr.bf16.mxu0 0
      %449 = vmatpush1.bf16.msra.mxu0 %v432
      %450 = vmatprep.subr.bf16.mxu0 0
      %451 = vmatpush1.bf16.msra.mxu0 %v433
      %452 = vmatprep.subr.bf16.mxu0 0
      %453 = vmatpush1.bf16.msra.mxu0 %v434
      %454 = vmatprep.subr.bf16.mxu0 0
      %455 = vmatpush1.bf16.msra.mxu0 %v435
      %456 = vmatprep.subr.bf16.mxu0 0
      %457 = vmatpush1.bf16.msra.mxu0 %v436
      %458 = vmatprep.subr.bf16.mxu0 0
      %459 = vmatpush1.bf16.msra.mxu0 %v437
      %460 = vmatprep.subr.bf16.mxu0 0
      %461 = vmatpush1.bf16.msra.mxu0 %v438
      %462 = vmatprep.subr.bf16.mxu0 0
      %463 = vmatpush1.bf16.msra.mxu0 %v439
      %464 = vmatprep.subr.bf16.mxu0 0
      %465 = vmatpush1.bf16.msra.mxu0 0
      %466 = vmatprep.subr.bf16.mxu0 0
      %467 = vmatpush1.bf16.msra.mxu0 0
      %468 = vmatprep.subr.bf16.mxu0 0
      %469 = vmatpush1.bf16.msra.mxu0 0
      %470 = vmatprep.subr.bf16.mxu0 0
      %471 = vmatpush1.bf16.msra.mxu0 0
      %472 = vmatprep.subr.bf16.mxu0 0
      %473 = vmatpush1.bf16.msra.mxu0 0
      %474 = vmatprep.subr.bf16.mxu0 0
      %475 = vmatpush1.bf16.msra.mxu0 0
      %476 = vmatprep.subr.bf16.mxu0 0
      %477 = vmatpush1.bf16.msra.mxu0 0
      %478 = vmatprep.subr.bf16.mxu0 0
      %479 = vmatpush1.bf16.msra.mxu0 0
      %480 = vmatprep.mubr.bf16.mxu0 0
      %481 = vmatmul.mubr.bf16.gmra.mrb[0].mxu0 %v368
      %v482 = vpop.f32.mrb[0].mxu0
      %v483 = vadd.f32 0.0, %v482
      %v484 = vpop.f32.mrb[0].mxu0
      %v485 = vpop.f32.mrb[0].mxu0
      %v486 = vadd.f32 0.0, %v485
      %v487 = vpop.f32.mrb[0].mxu0
      %488 = vmatprep.mubr.bf16.mxu0 0
      %489 = vmatmul.mubr.bf16.gmra.mrb[0].mxu0 %v369
      %v490 = vpop.f32.mrb[0].mxu0
      %v491 = vadd.f32 0.0, %v490
      %v492 = vpop.f32.mrb[0].mxu0
      %v493 = vpop.f32.mrb[0].mxu0
      %v494 = vadd.f32 0.0, %v493
      %v495 = vpop.f32.mrb[0].mxu0
      %496 = vmatprep.mubr.bf16.mxu0 0
      %497 = vmatmul.mubr.bf16.gmra.mrb[0].mxu0 %v370
      %v498 = vpop.f32.mrb[0].mxu0
      %v499 = vadd.f32 0.0, %v498
      %v500 = vpop.f32.mrb[0].mxu0
      %v501 = vpop.f32.mrb[0].mxu0
      %v502 = vadd.f32 0.0, %v501
      %v503 = vpop.f32.mrb[0].mxu0
      %504 = vmatprep.mubr.bf16.mxu0 0
      %505 = vmatmul.mubr.bf16.gmra.mrb[0].mxu0 %v371
      %v506 = vpop.f32.mrb[0].mxu0
      %v507 = vadd.f32 0.0, %v506
      %v508 = vpop.f32.mrb[0].mxu0
      %v509 = vpop.f32.mrb[0].mxu0
      %v510 = vadd.f32 0.0, %v509
      %v511 = vpop.f32.mrb[0].mxu0
      %512 = vmatprep.mubr.bf16.mxu0 0
      %513 = vmatmul.mubr.bf16.gmra.mrb[0].mxu0 %v372
      %v514 = vpop.f32.mrb[0].mxu0
      %v515 = vadd.f32 0.0, %v514
      %v516 = vpop.f32.mrb[0].mxu0
      %v517 = vpop.f32.mrb[0].mxu0
      %v518 = vadd.f32 0.0, %v517
      %v519 = vpop.f32.mrb[0].mxu0
      %520 = vmatprep.mubr.bf16.mxu0 0
      %521 = vmatmul.mubr.bf16.gmra.mrb[0].mxu0 %v373
      %v522 = vpop.f32.mrb[0].mxu0
      %v523 = vadd.f32 0.0, %v522
      %v524 = vpop.f32.mrb[0].mxu0
      %v525 = vpop.f32.mrb[0].mxu0
      %v526 = vadd.f32 0.0, %v525
      %v527 = vpop.f32.mrb[0].mxu0
      %528 = vmatprep.mubr.bf16.mxu0 0
      %529 = vmatmul.mubr.bf16.gmra.mrb[0].mxu0 %v374
      %v530 = vpop.f32.mrb[0].mxu0
      %v531 = vadd.f32 0.0, %v530
      %v532 = vpop.f32.mrb[0].mxu0
      %v533 = vpop.f32.mrb[0].mxu0
      %v534 = vadd.f32 0.0, %v533
      %v535 = vpop.f32.mrb[0].mxu0
      %536 = vmatprep.mubr.bf16.mxu0 0
      %537 = vmatmul.mubr.bf16.gmra.mrb[0].mxu0 %v375
      %v538 = vpop.f32.mrb[0].mxu0
      %v539 = vadd.f32 0.0, %v538
      %v540 = vpop.f32.mrb[0].mxu0
      %v541 = vpop.f32.mrb[0].mxu0
      %v542 = vadd.f32 0.0, %v541
      %v543 = vpop.f32.mrb[0].mxu0
      %544 = vmatprep.mubr.bf16.mxu0 0
      %545 = vmatmul.mubr.bf16.gmra.mrb[0].mxu0 %v376
      %v546 = vpop.f32.mrb[0].mxu0
      %v547 = vadd.f32 0.0, %v546
      %v548 = vpop.f32.mrb[0].mxu0
      %v549 = vpop.f32.mrb[0].mxu0
      %v550 = vadd.f32 0.0, %v549
      %v551 = vpop.f32.mrb[0].mxu0
      %552 = vmatprep.mubr.bf16.mxu0 0
      %553 = vmatmul.mubr.bf16.gmra.mrb[0].mxu0 %v377
      %v554 = vpop.f32.mrb[0].mxu0
      %v555 = vadd.f32 0.0, %v554
      %v556 = vpop.f32.mrb[0].mxu0
      %v557 = vpop.f32.mrb[0].mxu0
      %v558 = vadd.f32 0.0, %v557
      %v559 = vpop.f32.mrb[0].mxu0
      %560 = vmatprep.mubr.bf16.mxu0 0
      %561 = vmatmul.mubr.bf16.gmra.mrb[0].mxu0 %v378
      %v562 = vpop.f32.mrb[0].mxu0
      %v563 = vadd.f32 0.0, %v562
      %v564 = vpop.f32.mrb[0].mxu0
      %v565 = vpop.f32.mrb[0].mxu0
      %v566 = vadd.f32 0.0, %v565
      %v567 = vpop.f32.mrb[0].mxu0
      %568 = vmatprep.mubr.bf16.mxu0 0
      %569 = vmatmul.mubr.bf16.gmra.mrb[0].mxu0 %v379
      %v570 = vpop.f32.mrb[0].mxu0
      %v571 = vadd.f32 0.0, %v570
      %v572 = vpop.f32.mrb[0].mxu0
      %v573 = vpop.f32.mrb[0].mxu0
      %v574 = vadd.f32 0.0, %v573
      %v575 = vpop.f32.mrb[0].mxu0
      %576 = vmatprep.mubr.bf16.mxu0 0
      %577 = vmatmul.mubr.bf16.gmra.mrb[0].mxu0 %v380
      %v578 = vpop.f32.mrb[0].mxu0
      %v579 = vadd.f32 0.0, %v578
      %v580 = vpop.f32.mrb[0].mxu0
      %v581 = vpop.f32.mrb[0].mxu0
      %v582 = vadd.f32 0.0, %v581
      %v583 = vpop.f32.mrb[0].mxu0
      %584 = vmatprep.mubr.bf16.mxu0 0
      %585 = vmatmul.mubr.bf16.gmra.mrb[0].mxu0 %v381
      %v586 = vpop.f32.mrb[0].mxu0
      %v587 = vadd.f32 0.0, %v586
      %v588 = vpop.f32.mrb[0].mxu0
      %v589 = vpop.f32.mrb[0].mxu0
      %v590 = vadd.f32 0.0, %v589
      %v591 = vpop.f32.mrb[0].mxu0
      %592 = vmatprep.mubr.bf16.mxu0 0
      %593 = vmatmul.mubr.bf16.gmra.mrb[0].mxu0 %v382
      %v594 = vpop.f32.mrb[0].mxu0
      %v595 = vadd.f32 0.0, %v594
      %v596 = vpop.f32.mrb[0].mxu0
      %v597 = vpop.f32.mrb[0].mxu0
      %v598 = vadd.f32 0.0, %v597
      %v599 = vpop.f32.mrb[0].mxu0
      %600 = vmatprep.mubr.bf16.mxu0 0
      %601 = vmatmul.mubr.bf16.gmra.mrb[0].mxu0 %v383
      %v602 = vpop.f32.mrb[0].mxu0
      %v603 = vadd.f32 0.0, %v602
      %v604 = vpop.f32.mrb[0].mxu0
      %v605 = vpop.f32.mrb[0].mxu0
      %v606 = vadd.f32 0.0, %v605
      %v607 = vpop.f32.mrb[0].mxu0
      %608 = vdwg.mxu0
      %v610 = vlaneseq
      %v611 = vshrl.u32 %v610, 7
      %v612 = vsub.s32 0, %v611
      %v613 = vrot.slane %v269, %v612
      %v615 = vmul.f32 %v483, %v613
      %v616 = vmul.f32 %v486, %v613
      %v617 = vmul.f32 %v491, %v613
      %v618 = vmul.f32 %v494, %v613
      %v619 = vmul.f32 %v499, %v613
      %v620 = vmul.f32 %v502, %v613
      %v621 = vmul.f32 %v507, %v613
      %v622 = vmul.f32 %v510, %v613
      %v623 = vmul.f32 %v515, %v613
      %v624 = vmul.f32 %v518, %v613
      %v625 = vmul.f32 %v523, %v613
      %v626 = vmul.f32 %v526, %v613
      %v627 = vmul.f32 %v531, %v613
      %v628 = vmul.f32 %v534, %v613
      %v629 = vmul.f32 %v539, %v613
      %v630 = vmul.f32 %v542, %v613
      %v631 = vmul.f32 %v547, %v613
      %v632 = vmul.f32 %v550, %v613
      %v633 = vmul.f32 %v555, %v613
      %v634 = vmul.f32 %v558, %v613
      %v635 = vmul.f32 %v563, %v613
      %v636 = vmul.f32 %v566, %v613
      %v637 = vmul.f32 %v571, %v613
      %v638 = vmul.f32 %v574, %v613
      %v639 = vmul.f32 %v579, %v613
      %v640 = vmul.f32 %v582, %v613
      %v641 = vmul.f32 %v587, %v613
      %v642 = vmul.f32 %v590, %v613
      %v643 = vmul.f32 %v595, %v613
      %v644 = vmul.f32 %v598, %v613
      %v645 = vmul.f32 %v603, %v613
      %v646 = vmul.f32 %v606, %v613
      %v648 = vlaneseq
      %v649 = vshrl.u32 %v648, 7
      %v650 = vsub.s32 0, %v649
      %v651 = vrot.slane %v271, %v650
      %v653 = vadd.f32 %v615, %v651
      %v654 = vadd.f32 %v616, %v651
      %v655 = vadd.f32 %v617, %v651
      %v656 = vadd.f32 %v618, %v651
      %v657 = vadd.f32 %v619, %v651
      %v658 = vadd.f32 %v620, %v651
      %v659 = vadd.f32 %v621, %v651
      %v660 = vadd.f32 %v622, %v651
      %v661 = vadd.f32 %v623, %v651
      %v662 = vadd.f32 %v624, %v651
      %v663 = vadd.f32 %v625, %v651
      %v664 = vadd.f32 %v626, %v651
      %v665 = vadd.f32 %v627, %v651
      %v666 = vadd.f32 %v628, %v651
      %v667 = vadd.f32 %v629, %v651
      %v668 = vadd.f32 %v630, %v651
      %v669 = vadd.f32 %v631, %v651
      %v670 = vadd.f32 %v632, %v651
      %v671 = vadd.f32 %v633, %v651
      %v672 = vadd.f32 %v634, %v651
      %v673 = vadd.f32 %v635, %v651
      %v674 = vadd.f32 %v636, %v651
      %v675 = vadd.f32 %v637, %v651
      %v676 = vadd.f32 %v638, %v651
      %v677 = vadd.f32 %v639, %v651
      %v678 = vadd.f32 %v640, %v651
      %v679 = vadd.f32 %v641, %v651
      %v680 = vadd.f32 %v642, %v651
      %v681 = vadd.f32 %v643, %v651
      %v682 = vadd.f32 %v644, %v651
      %v683 = vadd.f32 %v645, %v651
      %v684 = vadd.f32 %v646, %v651
      %v685 = vmax.f32 %v653, 0.0
      %v686 = vmax.f32 %v654, 0.0
      %v687 = vmax.f32 %v655, 0.0
      %v688 = vmax.f32 %v656, 0.0
      %v689 = vmax.f32 %v657, 0.0
      %v690 = vmax.f32 %v658, 0.0
      %v691 = vmax.f32 %v659, 0.0
      %v692 = vmax.f32 %v660, 0.0
      %v693 = vmax.f32 %v661, 0.0
      %v694 = vmax.f32 %v662, 0.0
      %v695 = vmax.f32 %v663, 0.0
      %v696 = vmax.f32 %v664, 0.0
      %v697 = vmax.f32 %v665, 0.0
      %v698 = vmax.f32 %v666, 0.0
      %v699 = vmax.f32 %v667, 0.0
      %v700 = vmax.f32 %v668, 0.0
      %v701 = vmax.f32 %v669, 0.0
      %v702 = vmax.f32 %v670, 0.0
      %v703 = vmax.f32 %v671, 0.0
      %v704 = vmax.f32 %v672, 0.0
      %v705 = vmax.f32 %v673, 0.0
      %v706 = vmax.f32 %v674, 0.0
      %v707 = vmax.f32 %v675, 0.0
      %v708 = vmax.f32 %v676, 0.0
      %v709 = vmax.f32 %v677, 0.0
      %v710 = vmax.f32 %v678, 0.0
      %v711 = vmax.f32 %v679, 0.0
      %v712 = vmax.f32 %v680, 0.0
      %v713 = vmax.f32 %v681, 0.0
      %v714 = vmax.f32 %v682, 0.0
      %v715 = vmax.f32 %v683, 0.0
      %v716 = vmax.f32 %v684, 0.0
      %v717 = vpack.c.bf16 %v686, %v685
      %v718 = vpack.c.bf16 %v688, %v687
      %v719 = vpack.c.bf16 %v690, %v689
      %v720 = vpack.c.bf16 %v692, %v691
      %v721 = vpack.c.bf16 %v694, %v693
      %v722 = vpack.c.bf16 %v696, %v695
      %v723 = vpack.c.bf16 %v698, %v697
      %v724 = vpack.c.bf16 %v700, %v699
      %v725 = vpack.c.bf16 %v702, %v701
      %v726 = vpack.c.bf16 %v704, %v703
      %v727 = vpack.c.bf16 %v706, %v705
      %v728 = vpack.c.bf16 %v708, %v707
      %v729 = vpack.c.bf16 %v710, %v709
      %v730 = vpack.c.bf16 %v712, %v711
      %v731 = vpack.c.bf16 %v714, %v713
      %v732 = vpack.c.bf16 %v716, %v715
      %v749 = vunpack.c.l.b16 %v717
      %v750 = vunpack.c.h.b16 %v717
      %v751 = vunpack.c.l.b16 %v718
      %v752 = vunpack.c.h.b16 %v718
      %v753 = vunpack.c.l.b16 %v719
      %v754 = vunpack.c.h.b16 %v719
      %v755 = vunpack.c.l.b16 %v720
      %v756 = vunpack.c.h.b16 %v720
      %v757 = vunpack.c.l.b16 %v721
      %v758 = vunpack.c.h.b16 %v721
      %v759 = vunpack.c.l.b16 %v722
      %v760 = vunpack.c.h.b16 %v722
      %v761 = vunpack.c.l.b16 %v723
      %v762 = vunpack.c.h.b16 %v723
      %v763 = vunpack.c.l.b16 %v724
      %v764 = vunpack.c.h.b16 %v724
      %v765 = vunpack.c.l.b16 %v725
      %v766 = vunpack.c.h.b16 %v725
      %v767 = vunpack.c.l.b16 %v726
      %v768 = vunpack.c.h.b16 %v726
      %v769 = vunpack.c.l.b16 %v727
      %v770 = vunpack.c.h.b16 %v727
      %v771 = vunpack.c.l.b16 %v728
      %v772 = vunpack.c.h.b16 %v728
      %v773 = vunpack.c.l.b16 %v729
      %v774 = vunpack.c.h.b16 %v729
      %v775 = vunpack.c.l.b16 %v730
      %v776 = vunpack.c.h.b16 %v730
      %v777 = vunpack.c.l.b16 %v731
      %v778 = vunpack.c.h.b16 %v731
      %v779 = vunpack.c.l.b16 %v732
      %v780 = vunpack.c.h.b16 %v732
      %v781 = vpack.c.b16 %v749, %v749
      %v782 = vpack.c.b16 %v750, %v750
      %v783 = vpack.c.b16 %v751, %v751
      %v784 = vpack.c.b16 %v752, %v752
      %v785 = vpack.c.b16 %v753, %v753
      %v786 = vpack.c.b16 %v754, %v754
      %v787 = vpack.c.b16 %v755, %v755
      %v788 = vpack.c.b16 %v756, %v756
      %v789 = vpack.c.b16 %v757, %v757
      %v790 = vpack.c.b16 %v758, %v758
      %v791 = vpack.c.b16 %v759, %v759
      %v792 = vpack.c.b16 %v760, %v760
      %v793 = vpack.c.b16 %v761, %v761
      %v794 = vpack.c.b16 %v762, %v762
      %v795 = vpack.c.b16 %v763, %v763
      %v796 = vpack.c.b16 %v764, %v764
      %v797 = vpack.c.b16 %v765, %v765
      %v798 = vpack.c.b16 %v766, %v766
      %v799 = vpack.c.b16 %v767, %v767
      %v800 = vpack.c.b16 %v768, %v768
      %v801 = vpack.c.b16 %v769, %v769
      %v802 = vpack.c.b16 %v770, %v770
      %v803 = vpack.c.b16 %v771, %v771
      %v804 = vpack.c.b16 %v772, %v772
      %v805 = vpack.c.b16 %v773, %v773
      %v806 = vpack.c.b16 %v774, %v774
      %v807 = vpack.c.b16 %v775, %v775
      %v808 = vpack.c.b16 %v776, %v776
      %v809 = vpack.c.b16 %v777, %v777
      %v810 = vpack.c.b16 %v778, %v778
      %v811 = vpack.c.b16 %v779, %v779
      %v812 = vpack.c.b16 %v780, %v780
      %845 = vst [vmem:[%s246] sm:$0xf] %v781
      %846 = vst [vmem:[%s246 + $0x4] sm:$0xf] %v782
      %847 = vst [vmem:[%s246 + $0x8] sm:$0xf] %v783
      %848 = vst [vmem:[%s246 + $0xc] sm:$0xf] %v784
      %849 = vst [vmem:[%s246 + $0x10] sm:$0xf] %v785
      %850 = vst [vmem:[%s246 + $0x14] sm:$0xf] %v786
      %851 = vst [vmem:[%s246 + $0x18] sm:$0xf] %v787
      %852 = vst [vmem:[%s246 + $0x1c] sm:$0xf] %v788
      %853 = vst [vmem:[%s246 + $0x20] sm:$0xf] %v789
      %854 = vst [vmem:[%s246 + $0x24] sm:$0xf] %v790
      %855 = vst [vmem:[%s246 + $0x28] sm:$0xf] %v791
      %856 = vst [vmem:[%s246 + $0x2c] sm:$0xf] %v792
      %857 = vst [vmem:[%s246 + $0x30] sm:$0xf] %v793
      %858 = vst [vmem:[%s246 + $0x34] sm:$0xf] %v794
      %859 = vst [vmem:[%s246 + $0x38] sm:$0xf] %v795
      %860 = vst [vmem:[%s246 + $0x3c] sm:$0xf] %v796
      %861 = vst [vmem:[%s246 + $0x40] sm:$0xf] %v797
      %862 = vst [vmem:[%s246 + $0x44] sm:$0xf] %v798
      %863 = vst [vmem:[%s246 + $0x48] sm:$0xf] %v799
      %864 = vst [vmem:[%s246 + $0x4c] sm:$0xf] %v800
      %865 = vst [vmem:[%s246 + $0x50] sm:$0xf] %v801
      %866 = vst [vmem:[%s246 + $0x54] sm:$0xf] %v802
      %867 = vst [vmem:[%s246 + $0x58] sm:$0xf] %v803
      %868 = vst [vmem:[%s246 + $0x5c] sm:$0xf] %v804
      %869 = vst [vmem:[%s246 + $0x60] sm:$0xf] %v805
      %870 = vst [vmem:[%s246 + $0x64] sm:$0xf] %v806
      %871 = vst [vmem:[%s246 + $0x68] sm:$0xf] %v807
      %872 = vst [vmem:[%s246 + $0x6c] sm:$0xf] %v808
      %873 = vst [vmem:[%s246 + $0x70] sm:$0xf] %v809
      %874 = vst [vmem:[%s246 + $0x74] sm:$0xf] %v810
      %875 = vst [vmem:[%s246 + $0x78] sm:$0xf] %v811
      %876 = vst [vmem:[%s246 + $0x7c] sm:$0xf] %v812
      %s877 = smul.u32 32, %s20
      %p878 = scmp.lt.s32.totalorder %s877, 63
      %s879 = scalar_select %p878, %s877, 63
      %p880 = scmp.lt.s32.totalorder %s21, 0
      %s881 = scalar_select %p880, %s21, 0
      %s882 = sadd.s32 %s881, %s879
      %s883 = smul.addr %s882, 4
      %s884 = scalar_lea.vmem %s5, %s883
      // Predicated region
      $region41: #{deform_conv_forward.3} parent=39 // pred_check
        %p885 = pneg %p158
      $region42: #{deform_conv_forward.3} parent=39 // pred_check_branch
        %887 = sbr.rel (%p885) target = $region44
      $region43: #{deform_conv_forward.3} parent=39 // pred_region
        %s888 = smul.u32 32, %s20
      $region44: #{deform_conv_forward.3} parent=39 // pred_fallthru
        _
    $region40: #{deform_conv_forward.3} parent=5 // pred_fallthru
      _
    %p889 = scmp.le.s32.totalorder 2, %s11
    // Predicated region
    $region45: #{deform_conv_forward.3} parent=5 // pred_check
      %p890 = pneg %p889
    $region46: #{deform_conv_forward.3} parent=5 // pred_check_branch
      %892 = sbr.rel (%p890) target = $region48
    $region47: #{deform_conv_forward.3} parent=5 // pred_region
      %s893 = ssub.s32 %s11, 2
      // Predicated region
      $region49: #{deform_conv_forward.3} parent=47 // pred_check
        %p894 = pneg %p164
      $region50: #{deform_conv_forward.3} parent=47 // pred_check_branch
        %896 = sbr.rel (%p894) target = $region52
      $region51: #{deform_conv_forward.3} parent=47 // pred_region
        %s897 = smul.u32 32, %s22
        %p898 = scmp.lt.s32.totalorder %s897, 63
        %s899 = scalar_select %p898, %s897, 63
        %p900 = scmp.lt.s32.totalorder %s23, 0
        %s901 = scalar_select %p900, %s23, 0
        %s902 = sadd.s32 %s901, %s899
        %s903 = smul.addr %s902, 4
        %s904 = scalar_lea.vmem %s5, %s903
      $region52: #{deform_conv_forward.3} parent=47 // pred_fallthru
        _
    $region48: #{deform_conv_forward.3} parent=5 // pred_fallthru
      _
  $region6: #{deform_conv_forward.3} parent=0 // loop_footer
    %s15 = sadd.s32 1, %s11
  $region7: #{deform_conv_forward.3} parent=0 // loop_footer_branch
    %10 = sbr.rel target = $region3
  $region8: #{deform_conv_forward.3} parent=0 // loop_exit
    _

</llo_original>
